<compile_context>
chip_gen: v7x
topology: tpu7x:2x2x1
jax: 0.10.0
libtpu: 0.0.40
codegen_flags: <defaults>
</compile_context>

<pallas_src>
import functools
import math

import jax
import jax.numpy as jnp
import numpy as np
from jax import lax
from jax.experimental import pallas as pl
from jax.experimental.pallas import tpu as pltpu


def _round_up(x, m):
    return ((x + m - 1) // m) * m


def _vmem_capacity_bytes():
    try:
        info = pltpu.get_tpu_info()
        cap = int(getattr(info, "vmem_capacity_bytes", 0))
        if cap > 0:
            return cap
    except Exception:
        pass
    return 64 * 1024 * 1024   # conservative (v7x-sized) fallback


# ---------------------------------------------------------------------------
# Kernels
# ---------------------------------------------------------------------------

def _stn_separable_kernel(coord_ref, img_ref, out_ref, *, C, K, M, P, GB, NG,
                          k_is_x):
    """Separable one-hot bilinear sampling (small channel count).

    coord_ref: (NB, 8, P) f32   rows = [x0, x1, y0, y1, 1-fx, fx, 1-fy, fy]
    img_ref  : (NB, C*M, K)     f32/bf16, rows ordered (c, m), cols = k
               (k, m) = (x, y) if k_is_x else (y, x)   [K is the MXU contraction]
    out_ref  : (NB*C, P)        rows ordered (b, c)
    """
    ROWS = GB * C                                    # multiple of 8 by construction
    ki = lax.broadcasted_iota(jnp.int32, (K, P), 0).astype(jnp.float32)
    mi = lax.broadcasted_iota(jnp.int32, (M, P), 0).astype(jnp.float32)
    if k_is_x:
        KI0, KI1, KW0, KW1 = 0, 1, 4, 5
        MI0, MI1, MW0, MW1 = 2, 3, 6, 7
    else:
        KI0, KI1, KW0, KW1 = 2, 3, 6, 7
        MI0, MI1, MW0, MW1 = 0, 1, 4, 5

    def group_body(g):
        rows = []
        for j in range(GB):                          # small static unroll (<= 8)
            b = g * GB + j
            cd = coord_ref[b]                        # (8, P) f32
            # Separable one-hot bilinear weights (duplicate-corner case is exact
            # because coords are clamped before floor -> frac == 0 at border).
            wk = (jnp.where(ki == cd[KI0:KI0 + 1, :], cd[KW0:KW0 + 1, :], 0.0)
                  + jnp.where(ki == cd[KI1:KI1 + 1, :], cd[KW1:KW1 + 1, :], 0.0))
            wm = (jnp.where(mi == cd[MI0:MI0 + 1, :], cd[MW0:MW0 + 1, :], 0.0)
                  + jnp.where(mi == cd[MI1:MI1 + 1, :], cd[MW1:MW1 + 1, :], 0.0))
            lhs = img_ref[b]                         # (C*M, K)
            # Stage 1 (MXU): contract over K = larger spatial dim.
            tmp = jnp.dot(lhs, wk.astype(lhs.dtype),
                          preferred_element_type=jnp.float32)      # (C*M, P) f32
            # Stage 2 (VPU mul + XLU sublane reduce): contract over M per lane.
            for c in range(C):
                rows.append(jnp.sum(tmp[c * M:(c + 1) * M, :] * wm,
                                    axis=0, keepdims=True))         # (1, P)
        blk = rows[0] if len(rows) == 1 else jnp.concatenate(rows, axis=0)
        off = pl.multiple_of(g * ROWS, ROWS)
        out_ref[pl.ds(off, ROWS), :] = blk.astype(out_ref.dtype)    # full-tile store

    if NG <= 2:
        for g in range(NG):
            group_body(g)
    else:
        def body(g, carry):
            group_body(g)
            return carry
        lax.fori_loop(0, NG, body, 0)                # bounds live ranges per group


def _stn_fused_kernel(coord_ref, img_ref, out_ref, *, C, H, W, P, GB, NG):
    """Fused bilinear sampling: single K = H*W MXU contraction per batch.

    coord_ref: (NB, 8, P) f32   rows = [x0, x1, y0, y1, 1-fx, fx, 1-fy, fy]
    img_ref  : (NB, C, H*W)     f32/bf16 (lane-dense flattened image)
    out_ref  : (NB*C, P)        rows ordered (b, c)
    """
    ROWS = GB * C
    r = lax.broadcasted_iota(jnp.int32, (H * W, P), 0)
    hh = (r // W).astype(jnp.float32)                # hoisted out of all loops
    ww = (r % W).astype(jnp.float32)

    def group_body(g):
        rows = []
        for j in range(GB):
            b = g * GB + j
            cd = coord_ref[b]                        # (8, P) f32
            x0 = cd[0:1, :]
            x1 = cd[1:2, :]
            y0 = cd[2:3, :]
            y1 = cd[3:4, :]
            wx0 = cd[4:5, :]
            wx1 = cd[5:6, :]
            wy0 = cd[6:7, :]
            wy1 = cd[7:8, :]
            wxy = ((jnp.where(hh == y0, wy0, 0.0) + jnp.where(hh == y1, wy1, 0.0))
                   * (jnp.where(ww == x0, wx0, 0.0) + jnp.where(ww == x1, wx1, 0.0)))
            lhs = img_ref[b]                         # (C, H*W)
            rows.append(jnp.dot(lhs, wxy.astype(lhs.dtype),
                                preferred_element_type=jnp.float32))  # (C, P)
        blk = rows[0] if len(rows) == 1 else jnp.concatenate(rows, axis=0)
        off = pl.multiple_of(g * ROWS, ROWS)
        out_ref[pl.ds(off, ROWS), :] = blk.astype(out_ref.dtype)

    if NG <= 2:
        for g in range(NG):
            group_body(g)
    else:
        def body(g, carry):
            group_body(g)
            return carry
        lax.fori_loop(0, NG, body, 0)


# ---------------------------------------------------------------------------
# Wrapper-side glue (affine matrix, image gather, hoisted coordinate math)
# ---------------------------------------------------------------------------

def _build_affine_and_images(img_dict, theta, img_ids, *, resolution,
                             SIFTscale, identity, featureMap=False):
    """Replicate the dict/imgIDs scatter and generateCartGrid affMat build."""
    kpLoc, scaling, rotation, Hs, Ws = theta
    kpLoc = jnp.asarray(kpLoc, jnp.float32)
    scaling = jnp.asarray(scaling, jnp.float32)
    rotation = jnp.asarray(rotation, jnp.float32)
    Hs = jnp.asarray(Hs, jnp.float32)
    Ws = jnp.asarray(Ws, jnp.float32)

    def _get(v):
        if isinstance(v, dict):
            return v['feat' if featureMap else 'img']
        return v

    keys = sorted(img_dict.keys())
    stacked = jnp.stack([jnp.asarray(_get(img_dict[k]), jnp.float32)
                         for k in keys], axis=0)
    key_to_slot = {k: i for i, k in enumerate(keys)}
    sel = jnp.array([key_to_slot[i] for i in img_ids], dtype=jnp.int32)
    img = stacked[sel]                               # (B, C, H, W)

    if identity:
        scaling_used = jnp.ones_like(scaling) * resolution
        rot = jnp.zeros_like(rotation)
    else:
        scaling_used = scaling
        rot = rotation * (np.pi / 180.0)

    s = (1.0 / Ws) * SIFTscale * scaling_used
    aspect = Ws / Hs
    aff = jnp.stack(
        [jnp.cos(rot) * s, -s * jnp.sin(rot), kpLoc[:, 0],
         s * aspect * jnp.sin(rot), jnp.cos(rot) * s * aspect, kpLoc[:, 1]],
        axis=-1).astype(jnp.float32)                 # (B, 6)
    return img, aff


def _precompute_sample_coords(aff, *, resolution, H, W):
    """Hoisted per-batch coordinate math for grid_sample(border, align_corners=True).

    Returns one merged (B, 8, P) f32 tensor:
      rows = [x0, x1, y0, y1, 1-fx, fx, 1-fy, fy]   (corner indices as exact floats)
    """
    res = resolution
    P = res * res
    base = jnp.linspace(-1.0, 1.0, res, dtype=jnp.float32)
    xb, yb = jnp.meshgrid(base, base)                # xb varies along width (w)
    xb = xb.reshape(1, P)                            # p = h*res + w ordering
    yb = yb.reshape(1, P)

    gx = aff[:, 0:1] * xb + aff[:, 1:2] * yb + aff[:, 2:3]      # (B, P)
    gy = aff[:, 3:4] * xb + aff[:, 4:5] * yb + aff[:, 5:6]

    # NOTE: clamp BEFORE floor so fx/fy are exactly 0 at the border; this keeps
    # the duplicate-corner (x0 == x1) case exact in the one-hot weight build.
    ix = jnp.clip((gx + 1.0) * 0.5 * (W - 1), 0.0, W - 1.0)
    iy = jnp.clip((gy + 1.0) * 0.5 * (H - 1), 0.0, H - 1.0)
    x0 = jnp.floor(ix)
    y0 = jnp.floor(iy)
    fx = ix - x0
    fy = iy - y0
    x1 = jnp.minimum(x0 + 1.0, W - 1.0)
    y1 = jnp.minimum(y0 + 1.0, H - 1.0)

    coord = jnp.stack([x0, x1, y0, y1, 1.0 - fx, fx, 1.0 - fy, fy], axis=1)
    return coord.astype(jnp.float32)                 # (B, 8, P)


# ---------------------------------------------------------------------------
# Public entry point
# ---------------------------------------------------------------------------

def spatial_transformer_cartesian(img_dict, theta, img_ids, *, resolution=32,
                                  SIFTscale=1.0, identity=False,
                                  featureMap=False,
                                  target_batches_per_step=8,
                                  use_bf16_matmul=True,
                                  out_dtype=jnp.float32,
                                  force_fused=None):
    assert resolution >= 2, "resolution must be >= 2 (align_corners linspace)"
    img, aff = _build_affine_and_images(
        img_dict, theta, img_ids, resolution=resolution,
        SIFTscale=SIFTscale, identity=identity, featureMap=featureMap)
    B, C, H, W = img.shape
    P = resolution * resolution

    coord = _precompute_sample_coords(aff, resolution=resolution, H=H, W=W)

    fused = (C >= 8) if force_fused is None else bool(force_fused)
    img_dtype = jnp.bfloat16 if use_bf16_matmul else jnp.float32

    if fused:
        # Lane-dense (C, H*W) image rows; single K = H*W MXU contraction.
        lhs = img.reshape(B, C, H * W).astype(img_dtype)
        lane_k = H * W
        lhs_rows = C
        K = M = k_is_x = None
    else:
        # Contract over the LARGER spatial dim on the MXU.
        if W >= H:
            K, M, k_is_x = W, H, True
            lhs = img.reshape(B, C * H, W).astype(img_dtype)
        else:
            K, M, k_is_x = H, W, False
            lhs = jnp.swapaxes(img, 2, 3).reshape(B, C * W, H).astype(img_dtype)
        lane_k = K
        lhs_rows = C * M

    # --- per-step VMEM working set & batch packing --------------------------
    need = 8 // math.gcd(C, 8)          # batches per store group (rows % 8 == 0)
    GB = need
    img_bytes = jnp.dtype(img_dtype).itemsize
    out_bytes = jnp.dtype(out_dtype).itemsize
    blk_img = _round_up(lhs_rows, 8) * max(_round_up(lane_k, 128), 128) * img_bytes
    blk_coord = 8 * P * 4
    blk_out = C * P * out_bytes
    per_batch = 2 * (blk_img + blk_coord + blk_out)           # double-buffered
    if fused:
        grp_scratch = GB * (H * W * P * 4 + C * P * 4)        # wxy + dot result
    else:
        grp_scratch = GB * (C * M * P * 4)                    # stage-1 temporary

    cap = _vmem_capacity_bytes()
    budget = cap // 2                   # ~32 MiB on v7x, ~64 MiB on v5e/v6e
    nb_cap = max(need, int((budget - grp_scratch) // max(1, per_batch)))
    nb_cap = max(need, (nb_cap // need) * need)
    nb = max(need, (max(1, target_batches_per_step) // need) * need)
    nb = min(nb, nb_cap)
    b_ceil = _round_up(B, need)
    nb = min(nb, b_ceil)
    # Keep >= 2 grid steps when the batch allows it (v7x: 2 TCs + pipelining).
    if b_ceil // nb < 2 and b_ceil >= 2 * need:
        nb = _round_up(max(1, (b_ceil + 1) // 2), need)
    NB = nb
    NG = NB // GB
    B_pad = _round_up(B, NB)
    grid = B_pad // NB

    if B_pad != B:
        pad = B_pad - B
        lhs = jnp.pad(lhs, ((0, pad), (0, 0), (0, 0)))
        coord = jnp.pad(coord, ((0, pad), (0, 0), (0, 0)))

    est_step = NB * 2 * (blk_img + blk_coord + blk_out) + grp_scratch
    vmem_limit = int(min(int(cap * 0.9),
                         max(32 * 1024 * 1024, 2 * est_step + 8 * 1024 * 1024)))

    if fused:
        kernel = functools.partial(_stn_fused_kernel, C=C, H=H, W=W, P=P,
                                   GB=GB, NG=NG)
        img_block = (NB, C, H * W)
    else:
        kernel = functools.partial(_stn_separable_kernel, C=C, K=K, M=M, P=P,
                                   GB=GB, NG=NG, k_is_x=k_is_x)
        img_block = (NB, lhs_rows, K)

    out_flat = pl.pallas_call(
        kernel,
        out_shape=jax.ShapeDtypeStruct((B_pad * C, P), out_dtype),
        grid=(grid,),
        in_specs=[
            pl.BlockSpec((NB, 8, P), lambda g: (g, 0, 0)),     # merged coords
            pl.BlockSpec(img_block, lambda g: (g, 0, 0)),      # source images
        ],
        out_specs=pl.BlockSpec((NB * C, P), lambda g: (g, 0)),
        compiler_params=pltpu.CompilerParams(
            dimension_semantics=("parallel",),
            vmem_limit_bytes=vmem_limit),
    )(coord, lhs)

    return out_flat[:B * C].reshape(B, C, resolution, resolution)


# ---------------------------------------------------------------------------
# Pure-JAX reference (affine_grid + grid_sample(border, align_corners=True))
# ---------------------------------------------------------------------------

def _reference(img_dict, theta, img_ids, *, resolution=32, SIFTscale=1.0,
               identity=False):
    img, aff = _build_affine_and_images(
        img_dict, theta, img_ids, resolution=resolution,
        SIFTscale=SIFTscale, identity=identity)
    B, C, H, W = img.shape

    base = jnp.linspace(-1.0, 1.0, resolution, dtype=jnp.float32)
    X, Y = jnp.meshgrid(base, base)                  # X varies along width

    def one(img_b, aff_b):
        gx = aff_b[0] * X + aff_b[1] * Y + aff_b[2]
        gy = aff_b[3] * X + aff_b[4] * Y + aff_b[5]
        ix = jnp.clip((gx + 1.0) * 0.5 * (W - 1), 0.0, W - 1.0)
        iy = jnp.clip((gy + 1.0) * 0.5 * (H - 1), 0.0, H - 1.0)
        x0 = jnp.floor(ix)
        y0 = jnp.floor(iy)
        fx = ix - x0
        fy = iy - y0
        x0i = x0.astype(jnp.int32)
        y0i = y0.astype(jnp.int32)
        x1i = jnp.minimum(x0i + 1, W - 1)
        y1i = jnp.minimum(y0i + 1, H - 1)

        def g(yi, xi):
            return img_b[:, yi, xi]                  # (C, res, res)

        return (g(y0i, x0i) * (1 - fy) * (1 - fx)
                + g(y0i, x1i) * (1 - fy) * fx
                + g(y1i, x0i) * fy * (1 - fx)
                + g(y1i, x1i) * fy * fx)

    return jax.vmap(one)(img, aff)


# ---------------------------------------------------------------------------
# Self-test
# ---------------------------------------------------------------------------

def _make_case(key, B, C, H, W, n_imgs=2):
    ks = jax.random.split(key, n_imgs + 3)
    img_dict = {i: jax.random.normal(ks[i], (C, H, W), jnp.float32)
                for i in range(n_imgs)}
    img_ids = [i % n_imgs for i in range(B)]
    kpLoc = jax.random.uniform(ks[n_imgs], (B, 2), minval=-0.3, maxval=0.3)
    scaling = jax.random.uniform(ks[n_imgs + 1], (B,), minval=8.0, maxval=24.0)
    rotation = jax.random.uniform(ks[n_imgs + 2], (B,), minval=-45.0, maxval=45.0)
    Hs = jnp.full((B,), float(H), jnp.float32)
    Ws = jnp.full((B,), float(W), jnp.float32)
    return img_dict, (kpLoc, scaling, rotation, Hs, Ws), img_ids


def _run_case(name, key, *, B, C, H, W, resolution, atol, **kwargs):
    img_dict, theta, img_ids = _make_case(key, B, C, H, W)
    ref = _reference(img_dict, theta, img_ids, resolution=resolution)
    out = spatial_transformer_cartesian(img_dict, theta, img_ids,
                                        resolution=resolution, **kwargs)
    out = jax.block_until_ready(out)
    assert out.shape == (B, C, resolution, resolution), (name, out.shape)
    err = float(jnp.max(jnp.abs(out.astype(jnp.float32) - ref)))
    assert err < atol, f"{name}: max abs err {err} >= {atol}"
    return err


if __name__ == "__main__":
    root = jax.random.PRNGKey(0)
    k1, k2, k3 = jax.random.split(root, 3)
    res = 32

    # 1) Default module config (C=4, 16x16 images): separable path, contract over W.
    _run_case("sep_f32", k1, B=4, C=4, H=16, W=16, resolution=res,
              atol=1e-4, use_bf16_matmul=False)
    _run_case("sep_bf16", k1, B=4, C=4, H=16, W=16, resolution=res,
              atol=5e-2, use_bf16_matmul=True)

    # 2) Tall images (H > W): separable path contracting over H; odd batch -> padding.
    _run_case("sep_tall_f32", k2, B=3, C=4, H=32, W=16, resolution=res,
              atol=1e-4, use_bf16_matmul=False)

    # 3) featureMap-style channel count: fused K = H*W MXU path (lane-dense images).
    _run_case("fused_f32", k3, B=2, C=8, H=16, W=16, resolution=res,
              atol=1e-4, use_bf16_matmul=False)

    # TODO(synk): 'polar' transform path (generatePolarGrid + nn.InstanceNorm2d)
    # is not exercised by the default cartesian config and is not implemented.
    print("KERNEL_OK")
</pallas_src>

<mosaic_0001>
module attributes {stable_mosaic.version = 11 : i64} {
  func.func @_stn_separable_kernel(%arg0: i32, %arg1: memref<2x8x1024xf32, #tpu.memory_space<vmem>>, %arg2: memref<2x64x16xf32, #tpu.memory_space<vmem>>, %arg3: memref<8x1024xf32, #tpu.memory_space<vmem>>) attributes {dimension_semantics = [#tpu.dimension_semantics<parallel>], iteration_bounds = array<i64: 2>, scalar_prefetch = 0 : i64, scratch_operands = 0 : i64, tpu.core_type = #tpu.core_type<tc>, window_params = [{transform_indices = @transform_0, window_bounds = array<i64: 2, 8, 1024>}, {transform_indices = @transform_1, window_bounds = array<i64: 2, 64, 16>}, {transform_indices = @transform_2, window_bounds = array<i64: 8, 1024>}]} {
    %0 = tpu.iota {dimensions = array<i32: 0>} : vector<16x1024xi32>
    %1 = arith.sitofp %0 : vector<16x1024xi32> to vector<16x1024xf32>
    %2 = tpu.iota {dimensions = array<i32: 0>} : vector<16x1024xi32>
    %3 = arith.sitofp %2 : vector<16x1024xi32> to vector<16x1024xf32>
    %c0 = arith.constant 0 : index
    %c0_0 = arith.constant 0 : index
    %c0_1 = arith.constant 0 : index
    %4 = vector.load %arg1[%c0, %c0_0, %c0_1] : memref<2x8x1024xf32, #tpu.memory_space<vmem>>, vector<1x8x1024xf32>
    %5 = vector.shape_cast %4 : vector<1x8x1024xf32> to vector<8x1024xf32>
    %6 = vector.extract_strided_slice %5 {offsets = [0, 0], sizes = [1, 1024], strides = [1, 1]} : vector<8x1024xf32> to vector<1x1024xf32>
    %7 = vector.broadcast %6 : vector<1x1024xf32> to vector<16x1024xf32>
    %8 = arith.cmpf oeq, %1, %7 : vector<16x1024xf32>
    %9 = vector.extract_strided_slice %5 {offsets = [4, 0], sizes = [1, 1024], strides = [1, 1]} : vector<8x1024xf32> to vector<1x1024xf32>
    %cst = arith.constant 0.000000e+00 : f32
    %10 = vector.shape_cast %9 : vector<1x1024xf32> to vector<1x1024xf32>
    %11 = vector.broadcast %10 : vector<1x1024xf32> to vector<16x1024xf32>
    %12 = vector.broadcast %cst : f32 to vector<16x1024xf32>
    %13 = arith.select %8, %11, %12 : vector<16x1024xi1>, vector<16x1024xf32>
    %14 = vector.extract_strided_slice %5 {offsets = [1, 0], sizes = [1, 1024], strides = [1, 1]} : vector<8x1024xf32> to vector<1x1024xf32>
    %15 = vector.broadcast %14 : vector<1x1024xf32> to vector<16x1024xf32>
    %16 = arith.cmpf oeq, %1, %15 : vector<16x1024xf32>
    %17 = vector.extract_strided_slice %5 {offsets = [5, 0], sizes = [1, 1024], strides = [1, 1]} : vector<8x1024xf32> to vector<1x1024xf32>
    %cst_2 = arith.constant 0.000000e+00 : f32
    %18 = vector.shape_cast %17 : vector<1x1024xf32> to vector<1x1024xf32>
    %19 = vector.broadcast %18 : vector<1x1024xf32> to vector<16x1024xf32>
    %20 = vector.broadcast %cst_2 : f32 to vector<16x1024xf32>
    %21 = arith.select %16, %19, %20 : vector<16x1024xi1>, vector<16x1024xf32>
    %22 = arith.addf %13, %21 : vector<16x1024xf32>
    %23 = vector.extract_strided_slice %5 {offsets = [2, 0], sizes = [1, 1024], strides = [1, 1]} : vector<8x1024xf32> to vector<1x1024xf32>
    %24 = vector.broadcast %23 : vector<1x1024xf32> to vector<16x1024xf32>
    %25 = arith.cmpf oeq, %3, %24 : vector<16x1024xf32>
    %26 = vector.extract_strided_slice %5 {offsets = [6, 0], sizes = [1, 1024], strides = [1, 1]} : vector<8x1024xf32> to vector<1x1024xf32>
    %cst_3 = arith.constant 0.000000e+00 : f32
    %27 = vector.shape_cast %26 : vector<1x1024xf32> to vector<1x1024xf32>
    %28 = vector.broadcast %27 : vector<1x1024xf32> to vector<16x1024xf32>
    %29 = vector.broadcast %cst_3 : f32 to vector<16x1024xf32>
    %30 = arith.select %25, %28, %29 : vector<16x1024xi1>, vector<16x1024xf32>
    %31 = vector.extract_strided_slice %5 {offsets = [3, 0], sizes = [1, 1024], strides = [1, 1]} : vector<8x1024xf32> to vector<1x1024xf32>
    %32 = vector.broadcast %31 : vector<1x1024xf32> to vector<16x1024xf32>
    %33 = arith.cmpf oeq, %3, %32 : vector<16x1024xf32>
    %34 = vector.extract_strided_slice %5 {offsets = [7, 0], sizes = [1, 1024], strides = [1, 1]} : vector<8x1024xf32> to vector<1x1024xf32>
    %cst_4 = arith.constant 0.000000e+00 : f32
    %35 = vector.shape_cast %34 : vector<1x1024xf32> to vector<1x1024xf32>
    %36 = vector.broadcast %35 : vector<1x1024xf32> to vector<16x1024xf32>
    %37 = vector.broadcast %cst_4 : f32 to vector<16x1024xf32>
    %38 = arith.select %33, %36, %37 : vector<16x1024xi1>, vector<16x1024xf32>
    %39 = arith.addf %30, %38 : vector<16x1024xf32>
    %c0_5 = arith.constant 0 : index
    %c0_6 = arith.constant 0 : index
    %c0_7 = arith.constant 0 : index
    %40 = vector.load %arg2[%c0_5, %c0_6, %c0_7] : memref<2x64x16xf32, #tpu.memory_space<vmem>>, vector<1x64x16xf32>
    %41 = vector.shape_cast %40 : vector<1x64x16xf32> to vector<64x16xf32>
    %cst_8 = arith.constant dense<0.000000e+00> : vector<64x1024xf32>
    %42 = tpu.matmul %41, %22, %cst_8 {dimension_numbers = #tpu.dot_dimension_numbers<[1], [0], [0], [1], [0, 0, 1, 1], [], []>} : vector<64x16xf32>, vector<16x1024xf32>, vector<64x1024xf32> -> vector<64x1024xf32>
    %43 = vector.extract_strided_slice %42 {offsets = [0, 0], sizes = [16, 1024], strides = [1, 1]} : vector<64x1024xf32> to vector<16x1024xf32>
    %44 = arith.mulf %43, %39 : vector<16x1024xf32>
    %cst_9 = arith.constant dense<0.000000e+00> : vector<1024xf32>
    %45 = vector.multi_reduction <add>, %44, %cst_9 [0] : vector<16x1024xf32> to vector<1024xf32>
    %46 = vector.shape_cast %45 : vector<1024xf32> to vector<1x1024xf32>
    %47 = vector.extract_strided_slice %42 {offsets = [16, 0], sizes = [16, 1024], strides = [1, 1]} : vector<64x1024xf32> to vector<16x1024xf32>
    %48 = arith.mulf %47, %39 : vector<16x1024xf32>
    %cst_10 = arith.constant dense<0.000000e+00> : vector<1024xf32>
    %49 = vector.multi_reduction <add>, %48, %cst_10 [0] : vector<16x1024xf32> to vector<1024xf32>
    %50 = vector.shape_cast %49 : vector<1024xf32> to vector<1x1024xf32>
    %51 = vector.extract_strided_slice %42 {offsets = [32, 0], sizes = [16, 1024], strides = [1, 1]} : vector<64x1024xf32> to vector<16x1024xf32>
    %52 = arith.mulf %51, %39 : vector<16x1024xf32>
    %cst_11 = arith.constant dense<0.000000e+00> : vector<1024xf32>
    %53 = vector.multi_reduction <add>, %52, %cst_11 [0] : vector<16x1024xf32> to vector<1024xf32>
    %54 = vector.shape_cast %53 : vector<1024xf32> to vector<1x1024xf32>
    %55 = vector.extract_strided_slice %42 {offsets = [48, 0], sizes = [16, 1024], strides = [1, 1]} : vector<64x1024xf32> to vector<16x1024xf32>
    %56 = arith.mulf %55, %39 : vector<16x1024xf32>
    %cst_12 = arith.constant dense<0.000000e+00> : vector<1024xf32>
    %57 = vector.multi_reduction <add>, %56, %cst_12 [0] : vector<16x1024xf32> to vector<1024xf32>
    %58 = vector.shape_cast %57 : vector<1024xf32> to vector<1x1024xf32>
    %c1 = arith.constant 1 : index
    %c0_13 = arith.constant 0 : index
    %c0_14 = arith.constant 0 : index
    %59 = vector.load %arg1[%c1, %c0_13, %c0_14] : memref<2x8x1024xf32, #tpu.memory_space<vmem>>, vector<1x8x1024xf32>
    %60 = vector.shape_cast %59 : vector<1x8x1024xf32> to vector<8x1024xf32>
    %61 = vector.extract_strided_slice %60 {offsets = [0, 0], sizes = [1, 1024], strides = [1, 1]} : vector<8x1024xf32> to vector<1x1024xf32>
    %62 = vector.broadcast %61 : vector<1x1024xf32> to vector<16x1024xf32>
    %63 = arith.cmpf oeq, %1, %62 : vector<16x1024xf32>
    %64 = vector.extract_strided_slice %60 {offsets = [4, 0], sizes = [1, 1024], strides = [1, 1]} : vector<8x1024xf32> to vector<1x1024xf32>
    %cst_15 = arith.constant 0.000000e+00 : f32
    %65 = vector.shape_cast %64 : vector<1x1024xf32> to vector<1x1024xf32>
    %66 = vector.broadcast %65 : vector<1x1024xf32> to vector<16x1024xf32>
    %67 = vector.broadcast %cst_15 : f32 to vector<16x1024xf32>
    %68 = arith.select %63, %66, %67 : vector<16x1024xi1>, vector<16x1024xf32>
    %69 = vector.extract_strided_slice %60 {offsets = [1, 0], sizes = [1, 1024], strides = [1, 1]} : vector<8x1024xf32> to vector<1x1024xf32>
    %70 = vector.broadcast %69 : vector<1x1024xf32> to vector<16x1024xf32>
    %71 = arith.cmpf oeq, %1, %70 : vector<16x1024xf32>
    %72 = vector.extract_strided_slice %60 {offsets = [5, 0], sizes = [1, 1024], strides = [1, 1]} : vector<8x1024xf32> to vector<1x1024xf32>
    %cst_16 = arith.constant 0.000000e+00 : f32
    %73 = vector.shape_cast %72 : vector<1x1024xf32> to vector<1x1024xf32>
    %74 = vector.broadcast %73 : vector<1x1024xf32> to vector<16x1024xf32>
    %75 = vector.broadcast %cst_16 : f32 to vector<16x1024xf32>
    %76 = arith.select %71, %74, %75 : vector<16x1024xi1>, vector<16x1024xf32>
    %77 = arith.addf %68, %76 : vector<16x1024xf32>
    %78 = vector.extract_strided_slice %60 {offsets = [2, 0], sizes = [1, 1024], strides = [1, 1]} : vector<8x1024xf32> to vector<1x1024xf32>
    %79 = vector.broadcast %78 : vector<1x1024xf32> to vector<16x1024xf32>
    %80 = arith.cmpf oeq, %3, %79 : vector<16x1024xf32>
    %81 = vector.extract_strided_slice %60 {offsets = [6, 0], sizes = [1, 1024], strides = [1, 1]} : vector<8x1024xf32> to vector<1x1024xf32>
    %cst_17 = arith.constant 0.000000e+00 : f32
    %82 = vector.shape_cast %81 : vector<1x1024xf32> to vector<1x1024xf32>
    %83 = vector.broadcast %82 : vector<1x1024xf32> to vector<16x1024xf32>
    %84 = vector.broadcast %cst_17 : f32 to vector<16x1024xf32>
    %85 = arith.select %80, %83, %84 : vector<16x1024xi1>, vector<16x1024xf32>
    %86 = vector.extract_strided_slice %60 {offsets = [3, 0], sizes = [1, 1024], strides = [1, 1]} : vector<8x1024xf32> to vector<1x1024xf32>
    %87 = vector.broadcast %86 : vector<1x1024xf32> to vector<16x1024xf32>
    %88 = arith.cmpf oeq, %3, %87 : vector<16x1024xf32>
    %89 = vector.extract_strided_slice %60 {offsets = [7, 0], sizes = [1, 1024], strides = [1, 1]} : vector<8x1024xf32> to vector<1x1024xf32>
    %cst_18 = arith.constant 0.000000e+00 : f32
    %90 = vector.shape_cast %89 : vector<1x1024xf32> to vector<1x1024xf32>
    %91 = vector.broadcast %90 : vector<1x1024xf32> to vector<16x1024xf32>
    %92 = vector.broadcast %cst_18 : f32 to vector<16x1024xf32>
    %93 = arith.select %88, %91, %92 : vector<16x1024xi1>, vector<16x1024xf32>
    %94 = arith.addf %85, %93 : vector<16x1024xf32>
    %c1_19 = arith.constant 1 : index
    %c0_20 = arith.constant 0 : index
    %c0_21 = arith.constant 0 : index
    %95 = vector.load %arg2[%c1_19, %c0_20, %c0_21] : memref<2x64x16xf32, #tpu.memory_space<vmem>>, vector<1x64x16xf32>
    %96 = vector.shape_cast %95 : vector<1x64x16xf32> to vector<64x16xf32>
    %cst_22 = arith.constant dense<0.000000e+00> : vector<64x1024xf32>
    %97 = tpu.matmul %96, %77, %cst_22 {dimension_numbers = #tpu.dot_dimension_numbers<[1], [0], [0], [1], [0, 0, 1, 1], [], []>} : vector<64x16xf32>, vector<16x1024xf32>, vector<64x1024xf32> -> vector<64x1024xf32>
    %98 = vector.extract_strided_slice %97 {offsets = [0, 0], sizes = [16, 1024], strides = [1, 1]} : vector<64x1024xf32> to vector<16x1024xf32>
    %99 = arith.mulf %98, %94 : vector<16x1024xf32>
    %cst_23 = arith.constant dense<0.000000e+00> : vector<1024xf32>
    %100 = vector.multi_reduction <add>, %99, %cst_23 [0] : vector<16x1024xf32> to vector<1024xf32>
    %101 = vector.shape_cast %100 : vector<1024xf32> to vector<1x1024xf32>
    %102 = vector.extract_strided_slice %97 {offsets = [16, 0], sizes = [16, 1024], strides = [1, 1]} : vector<64x1024xf32> to vector<16x1024xf32>
    %103 = arith.mulf %102, %94 : vector<16x1024xf32>
    %cst_24 = arith.constant dense<0.000000e+00> : vector<1024xf32>
    %104 = vector.multi_reduction <add>, %103, %cst_24 [0] : vector<16x1024xf32> to vector<1024xf32>
    %105 = vector.shape_cast %104 : vector<1024xf32> to vector<1x1024xf32>
    %106 = vector.extract_strided_slice %97 {offsets = [32, 0], sizes = [16, 1024], strides = [1, 1]} : vector<64x1024xf32> to vector<16x1024xf32>
    %107 = arith.mulf %106, %94 : vector<16x1024xf32>
    %cst_25 = arith.constant dense<0.000000e+00> : vector<1024xf32>
    %108 = vector.multi_reduction <add>, %107, %cst_25 [0] : vector<16x1024xf32> to vector<1024xf32>
    %109 = vector.shape_cast %108 : vector<1024xf32> to vector<1x1024xf32>
    %110 = vector.extract_strided_slice %97 {offsets = [48, 0], sizes = [16, 1024], strides = [1, 1]} : vector<64x1024xf32> to vector<16x1024xf32>
    %111 = arith.mulf %110, %94 : vector<16x1024xf32>
    %cst_26 = arith.constant dense<0.000000e+00> : vector<1024xf32>
    %112 = vector.multi_reduction <add>, %111, %cst_26 [0] : vector<16x1024xf32> to vector<1024xf32>
    %113 = vector.shape_cast %112 : vector<1024xf32> to vector<1x1024xf32>
    %114 = tpu.concatenate %46, %50, %54, %58, %101, %105, %109, %113 in 0 : vector<1x1024xf32>, vector<1x1024xf32>, vector<1x1024xf32>, vector<1x1024xf32>, vector<1x1024xf32>, vector<1x1024xf32>, vector<1x1024xf32>, vector<1x1024xf32> -> vector<8x1024xf32>
    %c0_i32 = arith.constant 0 : i32
    %115 = tpu.assume_multiple %c0_i32, 8 : i32
    %116 = arith.index_cast %115 : i32 to index
    %c0_27 = arith.constant 0 : index
    %117 = vector.load %arg3[%116, %c0_27] : memref<8x1024xf32, #tpu.memory_space<vmem>>, vector<8x1024xf32>
    tpu.vector_store %arg3[%116, %c0_27], %114 {strides = array<i32>} : memref<8x1024xf32, #tpu.memory_space<vmem>>, vector<8x1024xf32>,
    return
  }
  func.func @transform_0(%arg0: i32) -> (i32, i32, i32) {
    %c0_i32 = arith.constant 0 : i32
    %c0_i32_0 = arith.constant 0 : i32
    %c0_i32_1 = arith.constant 0 : i32
    return %arg0, %c0_i32, %c0_i32_0 : i32, i32, i32
  }
  func.func @transform_1(%arg0: i32) -> (i32, i32, i32) {
    %c0_i32 = arith.constant 0 : i32
    %c0_i32_0 = arith.constant 0 : i32
    %c0_i32_1 = arith.constant 0 : i32
    return %arg0, %c0_i32, %c0_i32_0 : i32, i32, i32
  }
  func.func @transform_2(%arg0: i32) -> (i32, i32) {
    %c0_i32 = arith.constant 0 : i32
    %c0_i32_0 = arith.constant 0 : i32
    return %arg0, %c0_i32 : i32, i32
  }
}

</mosaic_0001>

<llo_original>
// kernel: tpu_custom_call.1
$region0: #{tpu_custom_call.1}
  #allocation0 [shape = 'u32[]', space=smem, size = 0x4, offset = 0x4, fixed_abs, tag = 'smem constant byte address 0x4 - core index']
  #allocation1 [shape = 'u32[144,128]{1,0:T(1,128)}', space=vmem, size = 0x12000, scoped, tag = 'internal scratch']
  %s0 = inlined_call_operand.vmem [shape: f32[4,8,1024], index: 0, kind: input, shape index: {}]
  %s1 = inlined_call_operand.vmem [shape: f32[4,64,16], index: 1, kind: input, shape index: {}]
  %s2 = inlined_call_operand.hbm [shape: f32[16,1024], index: 2, kind: output, shape index: {}]
  %s3 = sld [smem:[#allocation0]]
  $region41: #{tpu_custom_call.1} parent=0
    _
  %s5 = ssub.s32 1, %s3
  %s6 = scalar_select 0, %s5, %s3
  $region1: #{tpu_custom_call.1} parent=0
    #allocation2 [shape = 'u8[65536]{0}', space=vmem, size = 0x10000, scoped, tag = 'output window, operand 0']
    #allocation3 [shape = 's32[2]{0}', space=sflag, size = 0x8, scoped, tag = 'scoped memory for tpu_custom_call.1']
    %7 = vsyncpa [#allocation3], 0
    %s8 = scalar_lea.sflag [#allocation3], 1
    %9 = vsyncpa %s8, 0
    loop: start=0, step=1, limit=4
    $region2: #{tpu_custom_call.1} parent=1 // loop_pre_header
      _
    $region3: #{tpu_custom_call.1} parent=1 // loop_header
      %s11 = sphi 0, %s15
      %p12 = scmp.ge.s32.totalorder %s11, 4
      %s21 = sphi 0, %s23
      %s24 = sphi 0, %s21
      %s25 = sphi 0, %s24
      %s41 = sphi 0, %s25
      %s47 = sphi 0, %s49
      %s50 = sphi 0, %s47
      %s51 = sphi 0, %s50
      %s67 = sphi 0, %s51
      %s73 = sphi 0, %s75
      %s76 = sphi 0, %s73
      %s77 = sphi 0, %s76
      %s93 = sphi 0, %s77
    $region4: #{tpu_custom_call.1} parent=1 // loop_header_branch
      %14 = sbr.rel (%p12) target = $region8
    $region5: #{tpu_custom_call.1} parent=1 // loop_body
      %s16 = ssub.s32 %s11, 1
      %s17 = ssub.s32 %s11, 2
      %s18 = sadd.s32 %s11, 1
      %s19 = ssub.s32 %s11, %s18
      %p20 = scmp.eq.s32.totalorder %s19, 0
      %s22 = sadd.s32 %s21, 1
      %s23 = scalar_select %p20, %s21, %s22
      %p26 = pneg %p20
      %p27 = scmp.eq.s32.totalorder %s11, 1
      %p28 = por %p26, %p27
      %p29 = scmp.ne.s32.totalorder %s21, %s24
      %p30 = scmp.eq.s32.totalorder %s11, 0
      %p31 = por %p29, %p30
      %p32 = scmp.ne.s32.totalorder %s21, %s24
      %p33 = scmp.eq.s32.totalorder %s16, 1
      %p34 = por %p32, %p33
      %p35 = scmp.ne.s32.totalorder %s24, %s25
      %p36 = scmp.eq.s32.totalorder %s16, 0
      %p37 = por %p35, %p36
      %p38 = scmp.ne.s32.totalorder %s24, %s25
      %p39 = scmp.eq.s32.totalorder %s17, 1
      %p40 = por %p38, %p39
      %p42 = scmp.ne.s32.totalorder %s25, %s41
      %p43 = scmp.eq.s32.totalorder %s17, 0
      %p44 = por %p42, %p43
      %s45 = ssub.s32 %s11, %s18
      %p46 = scmp.eq.s32.totalorder %s45, 0
      %s48 = sadd.s32 %s47, 1
      %s49 = scalar_select %p46, %s47, %s48
      %p52 = pneg %p46
      %p53 = scmp.eq.s32.totalorder %s11, 1
      %p54 = por %p52, %p53
      %p55 = scmp.ne.s32.totalorder %s47, %s50
      %p56 = scmp.eq.s32.totalorder %s11, 0
      %p57 = por %p55, %p56
      %p58 = scmp.ne.s32.totalorder %s47, %s50
      %p59 = scmp.eq.s32.totalorder %s16, 1
      %p60 = por %p58, %p59
      %p61 = scmp.ne.s32.totalorder %s50, %s51
      %p62 = scmp.eq.s32.totalorder %s16, 0
      %p63 = por %p61, %p62
      %p64 = scmp.ne.s32.totalorder %s50, %s51
      %p65 = scmp.eq.s32.totalorder %s17, 1
      %p66 = por %p64, %p65
      %p68 = scmp.ne.s32.totalorder %s51, %s67
      %p69 = scmp.eq.s32.totalorder %s17, 0
      %p70 = por %p68, %p69
      %s71 = ssub.s32 %s11, %s18
      %p72 = scmp.eq.s32.totalorder %s71, 0
      %s74 = sadd.s32 %s73, 1
      %s75 = scalar_select %p72, %s73, %s74
      %p78 = pneg %p72
      %p79 = scmp.eq.s32.totalorder %s11, 1
      %p80 = por %p78, %p79
      %p81 = scmp.ne.s32.totalorder %s73, %s76
      %p82 = scmp.eq.s32.totalorder %s11, 0
      %p83 = por %p81, %p82
      %p84 = scmp.ne.s32.totalorder %s73, %s76
      %p85 = scmp.eq.s32.totalorder %s16, 1
      %p86 = por %p84, %p85
      %p87 = scmp.ne.s32.totalorder %s76, %s77
      %p88 = scmp.eq.s32.totalorder %s16, 0
      %p89 = por %p87, %p88
      %p90 = scmp.ne.s32.totalorder %s76, %s77
      %p91 = scmp.eq.s32.totalorder %s17, 1
      %p92 = por %p90, %p91
      %p94 = scmp.ne.s32.totalorder %s77, %s93
      %p95 = scmp.eq.s32.totalorder %s17, 0
      %p96 = por %p94, %p95
      %p97 = scmp.le.s32.totalorder 1, %s11
      %p98 = scmp.lt.s32.totalorder %s11, 3
      %p99 = pnand %p97, %p98
      %p100 = pneg %p99
      // Predicated region
      $region9: #{tpu_custom_call.1} parent=5 // pred_check
        _
      $region10: #{tpu_custom_call.1} parent=5 // pred_check_branch
        %102 = sbr.rel (%p99) target = $region12
      $region11: #{tpu_custom_call.1} parent=5 // pred_region
        %s103 = ssub.s32 %s11, 1
      $region12: #{tpu_custom_call.1} parent=5 // pred_fallthru
        _
      %p104 = scmp.lt.s32.totalorder %s11, 2
      // Predicated region
      $region13: #{tpu_custom_call.1} parent=5 // pred_check
        %p105 = pneg %p104
      $region14: #{tpu_custom_call.1} parent=5 // pred_check_branch
        %107 = sbr.rel (%p105) target = $region16
      $region15: #{tpu_custom_call.1} parent=5 // pred_region
        // Predicated region
        $region17: #{tpu_custom_call.1} parent=15 // pred_check
          %p108 = pneg %p31
        $region18: #{tpu_custom_call.1} parent=15 // pred_check_branch
          %110 = sbr.rel (%p108) target = $region20
        $region19: #{tpu_custom_call.1} parent=15 // pred_region
          %s111 = smul.u32 2, %s11
          %p112 = scmp.lt.s32.totalorder %s111, 3
          %s113 = scalar_select %p112, %s111, 3
          %s114 = smul.addr %s113, 8
          %s115 = smul.addr %s114, 8
          %s116 = scalar_lea.vmem %s0, %s115
          %s117 = smul.u32 2, %s11
        $region20: #{tpu_custom_call.1} parent=15 // pred_fallthru
          _
        // Predicated region
        $region21: #{tpu_custom_call.1} parent=15 // pred_check
          %p118 = pneg %p57
        $region22: #{tpu_custom_call.1} parent=15 // pred_check_branch
          %120 = sbr.rel (%p118) target = $region24
        $region23: #{tpu_custom_call.1} parent=15 // pred_region
          %s121 = smul.u32 2, %s11
          %p122 = scmp.lt.s32.totalorder %s121, 3
          %s123 = scalar_select %p122, %s121, 3
          %s124 = smul.addr %s123, 8
          %s125 = smul.addr %s124, 8
          %s126 = scalar_lea.vmem %s1, %s125
          %s127 = smul.u32 2, %s11
        $region24: #{tpu_custom_call.1} parent=15 // pred_fallthru
          _
      $region16: #{tpu_custom_call.1} parent=5 // pred_fallthru
        _
      %p128 = scmp.le.s32.totalorder 1, %s11
      %p129 = scmp.lt.s32.totalorder %s11, 3
      %p130 = pnand %p128, %p129
      %p131 = pneg %p130
      // Predicated region
      $region25: #{tpu_custom_call.1} parent=5 // pred_check
        _
      $region26: #{tpu_custom_call.1} parent=5 // pred_check_branch
        %133 = sbr.rel (%p130) target = $region28
      $region27: #{tpu_custom_call.1} parent=5 // pred_region
        %s134 = ssub.s32 %s11, 1
        %s135 = smul.u32 2, %s16
        %p136 = scmp.lt.s32.totalorder %s135, 3
        %s137 = scalar_select %p136, %s135, 3
        %s138 = smul.addr %s137, 8
        %s139 = smul.addr %s138, 8
        %s140 = scalar_lea.vmem %s0, %s139
        %p141 = pneg %p37
        %p142 = pneg %p34
        %s143 = smul.u32 2, %s16
        %p144 = scmp.lt.s32.totalorder %s143, 3
        %s145 = scalar_select %p144, %s143, 3
        %s146 = smul.addr %s145, 8
        %s147 = smul.addr %s146, 8
        %s148 = scalar_lea.vmem %s1, %s147
        %p149 = pneg %p63
        %p150 = pneg %p60
        %p151 = pneg %p89
        %p152 = pneg %p86
        %s153 = sand.u32 %s76, 1
        %s154 = scalar_lea.sflag [#allocation3], %s153
        %s155 = sand.u32 %s76, 1
        %s156 = smul.addr %s155, 64
        %s157 = scalar_lea.vmem [#allocation2], %s156
        %s158 = smul.u32 2, %s16
        %p159 = scmp.lt.s32.totalorder %s158, 3
        %s160 = scalar_select %p159, %s158, 3
        %s161 = smul.addr %s160, 8
        %s162 = smul.addr %s161, 8
        %s163 = scalar_lea.vmem %s0, %s162
        %s164 = smul.u32 2, %s16
        %s165 = smul.u32 2, %s16
        %p166 = scmp.lt.s32.totalorder %s165, 3
        %s167 = scalar_select %p166, %s165, 3
        %s168 = smul.addr %s167, 8
        %s169 = smul.addr %s168, 8
        %s170 = scalar_lea.vmem %s1, %s169
        %s171 = smul.u32 2, %s16
        %v172 = vlaneseq
        %v173 = vshrl.u32 %v172, 7
        %v174 = vadd.s32 %v173, 8
        %v175 = vcvt.s32.f32 %v173
        %v176 = vcvt.s32.f32 %v174
        %v177 = vld [vmem:[%s163] sm:$0xff]
        %v178 = vld [vmem:[%s163 + $0x8] sm:$0xff]
        %v179 = vld [vmem:[%s163 + $0x10] sm:$0xff]
        %v180 = vld [vmem:[%s163 + $0x18] sm:$0xff]
        %v181 = vld [vmem:[%s163 + $0x20] sm:$0xff]
        %v182 = vld [vmem:[%s163 + $0x28] sm:$0xff]
        %v183 = vld [vmem:[%s163 + $0x30] sm:$0xff]
        %v184 = vld [vmem:[%s163 + $0x38] sm:$0xff]
        %v185 = vlaneseq
        %v186 = vshrl.u32 %v185, 7
        %v187 = vsub.s32 0, %v186
        %v188 = vrot.slane %v177, %v187
        %v189 = vlaneseq
        %v190 = vshrl.u32 %v189, 7
        %v191 = vsub.s32 0, %v190
        %v192 = vrot.slane %v178, %v191
        %v193 = vlaneseq
        %v194 = vshrl.u32 %v193, 7
        %v195 = vsub.s32 0, %v194
        %v196 = vrot.slane %v179, %v195
        %v197 = vlaneseq
        %v198 = vshrl.u32 %v197, 7
        %v199 = vsub.s32 0, %v198
        %v200 = vrot.slane %v180, %v199
        %v201 = vlaneseq
        %v202 = vshrl.u32 %v201, 7
        %v203 = vsub.s32 0, %v202
        %v204 = vrot.slane %v181, %v203
        %v205 = vlaneseq
        %v206 = vshrl.u32 %v205, 7
        %v207 = vsub.s32 0, %v206
        %v208 = vrot.slane %v182, %v207
        %v209 = vlaneseq
        %v210 = vshrl.u32 %v209, 7
        %v211 = vsub.s32 0, %v210
        %v212 = vrot.slane %v183, %v211
        %v213 = vlaneseq
        %v214 = vshrl.u32 %v213, 7
        %v215 = vsub.s32 0, %v214
        %v216 = vrot.slane %v184, %v215
        %vm217 = vcmp.eq.f32.partialorder %v175, %v188
        %vm218 = vcmp.eq.f32.partialorder %v175, %v192
        %vm219 = vcmp.eq.f32.partialorder %v175, %v196
        %vm220 = vcmp.eq.f32.partialorder %v175, %v200
        %vm221 = vcmp.eq.f32.partialorder %v175, %v204
        %vm222 = vcmp.eq.f32.partialorder %v175, %v208
        %vm223 = vcmp.eq.f32.partialorder %v175, %v212
        %vm224 = vcmp.eq.f32.partialorder %v175, %v216
        %vm225 = vcmp.eq.f32.partialorder %v176, %v188
        %vm226 = vcmp.eq.f32.partialorder %v176, %v192
        %vm227 = vcmp.eq.f32.partialorder %v176, %v196
        %vm228 = vcmp.eq.f32.partialorder %v176, %v200
        %vm229 = vcmp.eq.f32.partialorder %v176, %v204
        %vm230 = vcmp.eq.f32.partialorder %v176, %v208
        %vm231 = vcmp.eq.f32.partialorder %v176, %v212
        %vm232 = vcmp.eq.f32.partialorder %v176, %v216
        %v233 = vlaneseq
        %v234 = vshrl.u32 %v233, 7
        %v235 = vsub.s32 4, %v234
        %v236 = vrot.slane %v177, %v235
        %v237 = vlaneseq
        %v238 = vshrl.u32 %v237, 7
        %v239 = vsub.s32 4, %v238
        %v240 = vrot.slane %v178, %v239
        %v241 = vlaneseq
        %v242 = vshrl.u32 %v241, 7
        %v243 = vsub.s32 4, %v242
        %v244 = vrot.slane %v179, %v243
        %v245 = vlaneseq
        %v246 = vshrl.u32 %v245, 7
        %v247 = vsub.s32 4, %v246
        %v248 = vrot.slane %v180, %v247
        %v249 = vlaneseq
        %v250 = vshrl.u32 %v249, 7
        %v251 = vsub.s32 4, %v250
        %v252 = vrot.slane %v181, %v251
        %v253 = vlaneseq
        %v254 = vshrl.u32 %v253, 7
        %v255 = vsub.s32 4, %v254
        %v256 = vrot.slane %v182, %v255
        %v257 = vlaneseq
        %v258 = vshrl.u32 %v257, 7
        %v259 = vsub.s32 4, %v258
        %v260 = vrot.slane %v183, %v259
        %v261 = vlaneseq
        %v262 = vshrl.u32 %v261, 7
        %v263 = vsub.s32 4, %v262
        %v264 = vrot.slane %v184, %v263
        %v265 = vsel %vm217, %v236, 0.0
        %v266 = vsel %vm218, %v240, 0.0
        %v267 = vsel %vm219, %v244, 0.0
        %v268 = vsel %vm220, %v248, 0.0
        %v269 = vsel %vm221, %v252, 0.0
        %v270 = vsel %vm222, %v256, 0.0
        %v271 = vsel %vm223, %v260, 0.0
        %v272 = vsel %vm224, %v264, 0.0
        %v273 = vsel %vm225, %v236, 0.0
        %v274 = vsel %vm226, %v240, 0.0
        %v275 = vsel %vm227, %v244, 0.0
        %v276 = vsel %vm228, %v248, 0.0
        %v277 = vsel %vm229, %v252, 0.0
        %v278 = vsel %vm230, %v256, 0.0
        %v279 = vsel %vm231, %v260, 0.0
        %v280 = vsel %vm232, %v264, 0.0
        %v281 = vlaneseq
        %v282 = vshrl.u32 %v281, 7
        %v283 = vsub.s32 1, %v282
        %v284 = vrot.slane %v177, %v283
        %v285 = vlaneseq
        %v286 = vshrl.u32 %v285, 7
        %v287 = vsub.s32 1, %v286
        %v288 = vrot.slane %v178, %v287
        %v289 = vlaneseq
        %v290 = vshrl.u32 %v289, 7
        %v291 = vsub.s32 1, %v290
        %v292 = vrot.slane %v179, %v291
        %v293 = vlaneseq
        %v294 = vshrl.u32 %v293, 7
        %v295 = vsub.s32 1, %v294
        %v296 = vrot.slane %v180, %v295
        %v297 = vlaneseq
        %v298 = vshrl.u32 %v297, 7
        %v299 = vsub.s32 1, %v298
        %v300 = vrot.slane %v181, %v299
        %v301 = vlaneseq
        %v302 = vshrl.u32 %v301, 7
        %v303 = vsub.s32 1, %v302
        %v304 = vrot.slane %v182, %v303
        %v305 = vlaneseq
        %v306 = vshrl.u32 %v305, 7
        %v307 = vsub.s32 1, %v306
        %v308 = vrot.slane %v183, %v307
        %v309 = vlaneseq
        %v310 = vshrl.u32 %v309, 7
        %v311 = vsub.s32 1, %v310
        %v312 = vrot.slane %v184, %v311
        %vm313 = vcmp.eq.f32.partialorder %v175, %v284
        %vm314 = vcmp.eq.f32.partialorder %v175, %v288
        %vm315 = vcmp.eq.f32.partialorder %v175, %v292
        %vm316 = vcmp.eq.f32.partialorder %v175, %v296
        %vm317 = vcmp.eq.f32.partialorder %v175, %v300
        %vm318 = vcmp.eq.f32.partialorder %v175, %v304
        %vm319 = vcmp.eq.f32.partialorder %v175, %v308
        %vm320 = vcmp.eq.f32.partialorder %v175, %v312
        %vm321 = vcmp.eq.f32.partialorder %v176, %v284
        %vm322 = vcmp.eq.f32.partialorder %v176, %v288
        %vm323 = vcmp.eq.f32.partialorder %v176, %v292
        %vm324 = vcmp.eq.f32.partialorder %v176, %v296
        %vm325 = vcmp.eq.f32.partialorder %v176, %v300
        %vm326 = vcmp.eq.f32.partialorder %v176, %v304
        %vm327 = vcmp.eq.f32.partialorder %v176, %v308
        %vm328 = vcmp.eq.f32.partialorder %v176, %v312
        %v329 = vlaneseq
        %v330 = vshrl.u32 %v329, 7
        %v331 = vsub.s32 5, %v330
        %v332 = vrot.slane %v177, %v331
        %v333 = vlaneseq
        %v334 = vshrl.u32 %v333, 7
        %v335 = vsub.s32 5, %v334
        %v336 = vrot.slane %v178, %v335
        %v337 = vlaneseq
        %v338 = vshrl.u32 %v337, 7
        %v339 = vsub.s32 5, %v338
        %v340 = vrot.slane %v179, %v339
        %v341 = vlaneseq
        %v342 = vshrl.u32 %v341, 7
        %v343 = vsub.s32 5, %v342
        %v344 = vrot.slane %v180, %v343
        %v345 = vlaneseq
        %v346 = vshrl.u32 %v345, 7
        %v347 = vsub.s32 5, %v346
        %v348 = vrot.slane %v181, %v347
        %v349 = vlaneseq
        %v350 = vshrl.u32 %v349, 7
        %v351 = vsub.s32 5, %v350
        %v352 = vrot.slane %v182, %v351
        %v353 = vlaneseq
        %v354 = vshrl.u32 %v353, 7
        %v355 = vsub.s32 5, %v354
        %v356 = vrot.slane %v183, %v355
        %v357 = vlaneseq
        %v358 = vshrl.u32 %v357, 7
        %v359 = vsub.s32 5, %v358
        %v360 = vrot.slane %v184, %v359
        %v361 = vsel %vm313, %v332, 0.0
        %v362 = vsel %vm314, %v336, 0.0
        %v363 = vsel %vm315, %v340, 0.0
        %v364 = vsel %vm316, %v344, 0.0
        %v365 = vsel %vm317, %v348, 0.0
        %v366 = vsel %vm318, %v352, 0.0
        %v367 = vsel %vm319, %v356, 0.0
        %v368 = vsel %vm320, %v360, 0.0
        %v369 = vsel %vm321, %v332, 0.0
        %v370 = vsel %vm322, %v336, 0.0
        %v371 = vsel %vm323, %v340, 0.0
        %v372 = vsel %vm324, %v344, 0.0
        %v373 = vsel %vm325, %v348, 0.0
        %v374 = vsel %vm326, %v352, 0.0
        %v375 = vsel %vm327, %v356, 0.0
        %v376 = vsel %vm328, %v360, 0.0
        %v377 = vadd.f32 %v265, %v361
        %v378 = vadd.f32 %v266, %v362
        %v379 = vadd.f32 %v267, %v363
        %v380 = vadd.f32 %v268, %v364
        %v381 = vadd.f32 %v269, %v365
        %v382 = vadd.f32 %v270, %v366
        %v383 = vadd.f32 %v271, %v367
        %v384 = vadd.f32 %v272, %v368
        %v385 = vadd.f32 %v273, %v369
        %v386 = vadd.f32 %v274, %v370
        %v387 = vadd.f32 %v275, %v371
        %v388 = vadd.f32 %v276, %v372
        %v389 = vadd.f32 %v277, %v373
        %v390 = vadd.f32 %v278, %v374
        %v391 = vadd.f32 %v279, %v375
        %v392 = vadd.f32 %v280, %v376
        %v393 = vlaneseq
        %v394 = vshrl.u32 %v393, 7
        %v395 = vsub.s32 2, %v394
        %v396 = vrot.slane %v177, %v395
        %v397 = vlaneseq
        %v398 = vshrl.u32 %v397, 7
        %v399 = vsub.s32 2, %v398
        %v400 = vrot.slane %v178, %v399
        %v401 = vlaneseq
        %v402 = vshrl.u32 %v401, 7
        %v403 = vsub.s32 2, %v402
        %v404 = vrot.slane %v179, %v403
        %v405 = vlaneseq
        %v406 = vshrl.u32 %v405, 7
        %v407 = vsub.s32 2, %v406
        %v408 = vrot.slane %v180, %v407
        %v409 = vlaneseq
        %v410 = vshrl.u32 %v409, 7
        %v411 = vsub.s32 2, %v410
        %v412 = vrot.slane %v181, %v411
        %v413 = vlaneseq
        %v414 = vshrl.u32 %v413, 7
        %v415 = vsub.s32 2, %v414
        %v416 = vrot.slane %v182, %v415
        %v417 = vlaneseq
        %v418 = vshrl.u32 %v417, 7
        %v419 = vsub.s32 2, %v418
        %v420 = vrot.slane %v183, %v419
        %v421 = vlaneseq
        %v422 = vshrl.u32 %v421, 7
        %v423 = vsub.s32 2, %v422
        %v424 = vrot.slane %v184, %v423
        %vm425 = vcmp.eq.f32.partialorder %v175, %v396
        %vm426 = vcmp.eq.f32.partialorder %v175, %v400
        %vm427 = vcmp.eq.f32.partialorder %v175, %v404
        %vm428 = vcmp.eq.f32.partialorder %v175, %v408
        %vm429 = vcmp.eq.f32.partialorder %v175, %v412
        %vm430 = vcmp.eq.f32.partialorder %v175, %v416
        %vm431 = vcmp.eq.f32.partialorder %v175, %v420
        %vm432 = vcmp.eq.f32.partialorder %v175, %v424
        %vm433 = vcmp.eq.f32.partialorder %v176, %v396
        %vm434 = vcmp.eq.f32.partialorder %v176, %v400
        %vm435 = vcmp.eq.f32.partialorder %v176, %v404
        %vm436 = vcmp.eq.f32.partialorder %v176, %v408
        %vm437 = vcmp.eq.f32.partialorder %v176, %v412
        %vm438 = vcmp.eq.f32.partialorder %v176, %v416
        %vm439 = vcmp.eq.f32.partialorder %v176, %v420
        %vm440 = vcmp.eq.f32.partialorder %v176, %v424
        %v441 = vlaneseq
        %v442 = vshrl.u32 %v441, 7
        %v443 = vsub.s32 6, %v442
        %v444 = vrot.slane %v177, %v443
        %v445 = vlaneseq
        %v446 = vshrl.u32 %v445, 7
        %v447 = vsub.s32 6, %v446
        %v448 = vrot.slane %v178, %v447
        %v449 = vlaneseq
        %v450 = vshrl.u32 %v449, 7
        %v451 = vsub.s32 6, %v450
        %v452 = vrot.slane %v179, %v451
        %v453 = vlaneseq
        %v454 = vshrl.u32 %v453, 7
        %v455 = vsub.s32 6, %v454
        %v456 = vrot.slane %v180, %v455
        %v457 = vlaneseq
        %v458 = vshrl.u32 %v457, 7
        %v459 = vsub.s32 6, %v458
        %v460 = vrot.slane %v181, %v459
        %v461 = vlaneseq
        %v462 = vshrl.u32 %v461, 7
        %v463 = vsub.s32 6, %v462
        %v464 = vrot.slane %v182, %v463
        %v465 = vlaneseq
        %v466 = vshrl.u32 %v465, 7
        %v467 = vsub.s32 6, %v466
        %v468 = vrot.slane %v183, %v467
        %v469 = vlaneseq
        %v470 = vshrl.u32 %v469, 7
        %v471 = vsub.s32 6, %v470
        %v472 = vrot.slane %v184, %v471
        %v473 = vsel %vm425, %v444, 0.0
        %v474 = vsel %vm426, %v448, 0.0
        %v475 = vsel %vm427, %v452, 0.0
        %v476 = vsel %vm428, %v456, 0.0
        %v477 = vsel %vm429, %v460, 0.0
        %v478 = vsel %vm430, %v464, 0.0
        %v479 = vsel %vm431, %v468, 0.0
        %v480 = vsel %vm432, %v472, 0.0
        %v481 = vsel %vm433, %v444, 0.0
        %v482 = vsel %vm434, %v448, 0.0
        %v483 = vsel %vm435, %v452, 0.0
        %v484 = vsel %vm436, %v456, 0.0
        %v485 = vsel %vm437, %v460, 0.0
        %v486 = vsel %vm438, %v464, 0.0
        %v487 = vsel %vm439, %v468, 0.0
        %v488 = vsel %vm440, %v472, 0.0
        %v489 = vlaneseq
        %v490 = vshrl.u32 %v489, 7
        %v491 = vsub.s32 3, %v490
        %v492 = vrot.slane %v177, %v491
        %v493 = vlaneseq
        %v494 = vshrl.u32 %v493, 7
        %v495 = vsub.s32 3, %v494
        %v496 = vrot.slane %v178, %v495
        %v497 = vlaneseq
        %v498 = vshrl.u32 %v497, 7
        %v499 = vsub.s32 3, %v498
        %v500 = vrot.slane %v179, %v499
        %v501 = vlaneseq
        %v502 = vshrl.u32 %v501, 7
        %v503 = vsub.s32 3, %v502
        %v504 = vrot.slane %v180, %v503
        %v505 = vlaneseq
        %v506 = vshrl.u32 %v505, 7
        %v507 = vsub.s32 3, %v506
        %v508 = vrot.slane %v181, %v507
        %v509 = vlaneseq
        %v510 = vshrl.u32 %v509, 7
        %v511 = vsub.s32 3, %v510
        %v512 = vrot.slane %v182, %v511
        %v513 = vlaneseq
        %v514 = vshrl.u32 %v513, 7
        %v515 = vsub.s32 3, %v514
        %v516 = vrot.slane %v183, %v515
        %v517 = vlaneseq
        %v518 = vshrl.u32 %v517, 7
        %v519 = vsub.s32 3, %v518
        %v520 = vrot.slane %v184, %v519
        %vm521 = vcmp.eq.f32.partialorder %v175, %v492
        %vm522 = vcmp.eq.f32.partialorder %v175, %v496
        %vm523 = vcmp.eq.f32.partialorder %v175, %v500
        %vm524 = vcmp.eq.f32.partialorder %v175, %v504
        %vm525 = vcmp.eq.f32.partialorder %v175, %v508
        %vm526 = vcmp.eq.f32.partialorder %v175, %v512
        %vm527 = vcmp.eq.f32.partialorder %v175, %v516
        %vm528 = vcmp.eq.f32.partialorder %v175, %v520
        %vm529 = vcmp.eq.f32.partialorder %v176, %v492
        %vm530 = vcmp.eq.f32.partialorder %v176, %v496
        %vm531 = vcmp.eq.f32.partialorder %v176, %v500
        %vm532 = vcmp.eq.f32.partialorder %v176, %v504
        %vm533 = vcmp.eq.f32.partialorder %v176, %v508
        %vm534 = vcmp.eq.f32.partialorder %v176, %v512
        %vm535 = vcmp.eq.f32.partialorder %v176, %v516
        %vm536 = vcmp.eq.f32.partialorder %v176, %v520
        %v537 = vlaneseq
        %v538 = vshrl.u32 %v537, 7
        %v539 = vsub.s32 7, %v538
        %v540 = vrot.slane %v177, %v539
        %v541 = vlaneseq
        %v542 = vshrl.u32 %v541, 7
        %v543 = vsub.s32 7, %v542
        %v544 = vrot.slane %v178, %v543
        %v545 = vlaneseq
        %v546 = vshrl.u32 %v545, 7
        %v547 = vsub.s32 7, %v546
        %v548 = vrot.slane %v179, %v547
        %v549 = vlaneseq
        %v550 = vshrl.u32 %v549, 7
        %v551 = vsub.s32 7, %v550
        %v552 = vrot.slane %v180, %v551
        %v553 = vlaneseq
        %v554 = vshrl.u32 %v553, 7
        %v555 = vsub.s32 7, %v554
        %v556 = vrot.slane %v181, %v555
        %v557 = vlaneseq
        %v558 = vshrl.u32 %v557, 7
        %v559 = vsub.s32 7, %v558
        %v560 = vrot.slane %v182, %v559
        %v561 = vlaneseq
        %v562 = vshrl.u32 %v561, 7
        %v563 = vsub.s32 7, %v562
        %v564 = vrot.slane %v183, %v563
        %v565 = vlaneseq
        %v566 = vshrl.u32 %v565, 7
        %v567 = vsub.s32 7, %v566
        %v568 = vrot.slane %v184, %v567
        %v569 = vsel %vm521, %v540, 0.0
        %v570 = vsel %vm522, %v544, 0.0
        %v571 = vsel %vm523, %v548, 0.0
        %v572 = vsel %vm524, %v552, 0.0
        %v573 = vsel %vm525, %v556, 0.0
        %v574 = vsel %vm526, %v560, 0.0
        %v575 = vsel %vm527, %v564, 0.0
        %v576 = vsel %vm528, %v568, 0.0
        %v577 = vsel %vm529, %v540, 0.0
        %v578 = vsel %vm530, %v544, 0.0
        %v579 = vsel %vm531, %v548, 0.0
        %v580 = vsel %vm532, %v552, 0.0
        %v581 = vsel %vm533, %v556, 0.0
        %v582 = vsel %vm534, %v560, 0.0
        %v583 = vsel %vm535, %v564, 0.0
        %v584 = vsel %vm536, %v568, 0.0
        %v585 = vadd.f32 %v473, %v569
        %v586 = vadd.f32 %v474, %v570
        %v587 = vadd.f32 %v475, %v571
        %v588 = vadd.f32 %v476, %v572
        %v589 = vadd.f32 %v477, %v573
        %v590 = vadd.f32 %v478, %v574
        %v591 = vadd.f32 %v479, %v575
        %v592 = vadd.f32 %v480, %v576
        %v593 = vadd.f32 %v481, %v577
        %v594 = vadd.f32 %v482, %v578
        %v595 = vadd.f32 %v483, %v579
        %v596 = vadd.f32 %v484, %v580
        %v597 = vadd.f32 %v485, %v581
        %v598 = vadd.f32 %v486, %v582
        %v599 = vadd.f32 %v487, %v583
        %v600 = vadd.f32 %v488, %v584
        %v601 = vld [vmem:[%s170] sm:$0xff]
        %v602 = vld [vmem:[%s170 + $0x8] sm:$0xff]
        %v603 = vld [vmem:[%s170 + $0x10] sm:$0xff]
        %v604 = vld [vmem:[%s170 + $0x18] sm:$0xff]
        %v605 = vld [vmem:[%s170 + $0x20] sm:$0xff]
        %v606 = vld [vmem:[%s170 + $0x28] sm:$0xff]
        %v607 = vld [vmem:[%s170 + $0x30] sm:$0xff]
        %v608 = vld [vmem:[%s170 + $0x38] sm:$0xff]
        %vm609 = vcmask 130048
        %v611 = vsel %vm609, %v601, 0
        %v614 = vsel %vm609, %v602, 0
        %v617 = vsel %vm609, %v603, 0
        %v620 = vsel %vm609, %v604, 0
        %v623 = vsel %vm609, %v605, 0
        %v626 = vsel %vm609, %v606, 0
        %v629 = vsel %vm609, %v607, 0
        %v632 = vsel %vm609, %v608, 0
        %634 = vmatprep.subr.mxu0 %v378
        %635 = vmatpush1.msra.mxu0 %v377
        %636 = vmatprep.subr.mxu0 %v386
        %637 = vmatpush1.msra.mxu0 %v385
        %638 = vmatprep.subr.mxu0 0.0
        %639 = vmatpush1.msra.mxu0 0.0
        %640 = vmatprep.subr.mxu0 0.0
        %641 = vmatpush1.msra.mxu0 0.0
        %642 = vmatprep.subr.mxu0 0.0
        %643 = vmatpush1.msra.mxu0 0.0
        %644 = vmatprep.subr.mxu0 0.0
        %645 = vmatpush1.msra.mxu0 0.0
        %646 = vmatprep.subr.mxu0 0.0
        %647 = vmatpush1.msra.mxu0 0.0
        %648 = vmatprep.subr.mxu0 0.0
        %649 = vmatpush1.msra.mxu0 0.0
        %650 = vmatprep.subr.mxu0 0.0
        %651 = vmatpush1.msra.mxu0 0.0
        %652 = vmatprep.subr.mxu0 0.0
        %653 = vmatpush1.msra.mxu0 0.0
        %654 = vmatprep.subr.mxu0 0.0
        %655 = vmatpush1.msra.mxu0 0.0
        %656 = vmatprep.subr.mxu0 0.0
        %657 = vmatpush1.msra.mxu0 0.0
        %658 = vmatprep.subr.mxu0 0.0
        %659 = vmatpush1.msra.mxu0 0.0
        %660 = vmatprep.subr.mxu0 0.0
        %661 = vmatpush1.msra.mxu0 0.0
        %662 = vmatprep.subr.mxu0 0.0
        %663 = vmatpush1.msra.mxu0 0.0
        %664 = vmatprep.subr.mxu0 0.0
        %665 = vmatpush1.msra.mxu0 0.0
        %666 = vmatprep.subr.mxu0 0.0
        %667 = vmatpush1.msra.mxu0 0.0
        %668 = vmatprep.subr.mxu0 0.0
        %669 = vmatpush1.msra.mxu0 0.0
        %670 = vmatprep.subr.mxu0 0.0
        %671 = vmatpush1.msra.mxu0 0.0
        %672 = vmatprep.subr.mxu0 0.0
        %673 = vmatpush1.msra.mxu0 0.0
        %674 = vmatprep.subr.mxu0 0.0
        %675 = vmatpush1.msra.mxu0 0.0
        %676 = vmatprep.subr.mxu0 0.0
        %677 = vmatpush1.msra.mxu0 0.0
        %678 = vmatprep.subr.mxu0 0.0
        %679 = vmatpush1.msra.mxu0 0.0
        %680 = vmatprep.subr.mxu0 0.0
        %681 = vmatpush1.msra.mxu0 0.0
        %682 = vmatprep.subr.mxu0 0.0
        %683 = vmatpush1.msra.mxu0 0.0
        %684 = vmatprep.subr.mxu0 0.0
        %685 = vmatpush1.msra.mxu0 0.0
        %686 = vmatprep.subr.mxu0 0.0
        %687 = vmatpush1.msra.mxu0 0.0
        %688 = vmatprep.subr.mxu0 0.0
        %689 = vmatpush1.msra.mxu0 0.0
        %690 = vmatprep.subr.mxu0 0.0
        %691 = vmatpush1.msra.mxu0 0.0
        %692 = vmatprep.subr.mxu0 0.0
        %693 = vmatpush1.msra.mxu0 0.0
        %694 = vmatprep.subr.mxu0 0.0
        %695 = vmatpush1.msra.mxu0 0.0
        %696 = vmatprep.subr.mxu0 0.0
        %697 = vmatpush1.msra.mxu0 0.0
        %698 = vmatprep.mubr.f32.mxu0 0.0
        %699 = vmatmul.mubr.f32.gmra.mrb[0].mxu0 %v611
        %v700 = vpop.f32.mrb[0].mxu0
        %v701 = vadd.f32 0.0, %v700
        %v702 = vpop.f32.mrb[0].mxu0
        %v703 = vadd.f32 0.0, %v702
        %704 = vmatprep.mubr.f32.mxu0 0.0
        %705 = vmatmul.mubr.f32.gmra.mrb[0].mxu0 %v614
        %v706 = vpop.f32.mrb[0].mxu0
        %v707 = vadd.f32 0.0, %v706
        %v708 = vpop.f32.mrb[0].mxu0
        %v709 = vadd.f32 0.0, %v708
        %710 = vmatprep.mubr.f32.mxu0 0.0
        %711 = vmatmul.mubr.f32.gmra.mrb[0].mxu0 %v617
        %v712 = vpop.f32.mrb[0].mxu0
        %v713 = vadd.f32 0.0, %v712
        %v714 = vpop.f32.mrb[0].mxu0
        %v715 = vadd.f32 0.0, %v714
        %716 = vmatprep.mubr.f32.mxu0 0.0
        %717 = vmatmul.mubr.f32.gmra.mrb[0].mxu0 %v620
        %v718 = vpop.f32.mrb[0].mxu0
        %v719 = vadd.f32 0.0, %v718
        %v720 = vpop.f32.mrb[0].mxu0
        %v721 = vadd.f32 0.0, %v720
        %722 = vmatprep.mubr.f32.mxu0 0.0
        %723 = vmatmul.mubr.f32.gmra.mrb[0].mxu0 %v623
        %v724 = vpop.f32.mrb[0].mxu0
        %v725 = vadd.f32 0.0, %v724
        %v726 = vpop.f32.mrb[0].mxu0
        %v727 = vadd.f32 0.0, %v726
        %728 = vmatprep.mubr.f32.mxu0 0.0
        %729 = vmatmul.mubr.f32.gmra.mrb[0].mxu0 %v626
        %v730 = vpop.f32.mrb[0].mxu0
        %v731 = vadd.f32 0.0, %v730
        %v732 = vpop.f32.mrb[0].mxu0
        %v733 = vadd.f32 0.0, %v732
        %734 = vmatprep.mubr.f32.mxu0 0.0
        %735 = vmatmul.mubr.f32.gmra.mrb[0].mxu0 %v629
        %v736 = vpop.f32.mrb[0].mxu0
        %v737 = vadd.f32 0.0, %v736
        %v738 = vpop.f32.mrb[0].mxu0
        %v739 = vadd.f32 0.0, %v738
        %740 = vmatprep.mubr.f32.mxu0 0.0
        %741 = vmatmul.mubr.f32.gmra.mrb[0].mxu0 %v632
        %v742 = vpop.f32.mrb[0].mxu0
        %v743 = vadd.f32 0.0, %v742
        %v744 = vpop.f32.mrb[0].mxu0
        %v745 = vadd.f32 0.0, %v744
        %746 = vdwg.mxu0
        %747 = vmatprep.subr.mxu0 %v380
        %748 = vmatpush1.msra.mxu0 %v379
        %749 = vmatprep.subr.mxu0 %v388
        %750 = vmatpush1.msra.mxu0 %v387
        %751 = vmatprep.subr.mxu0 0.0
        %752 = vmatpush1.msra.mxu0 0.0
        %753 = vmatprep.subr.mxu0 0.0
        %754 = vmatpush1.msra.mxu0 0.0
        %755 = vmatprep.subr.mxu0 0.0
        %756 = vmatpush1.msra.mxu0 0.0
        %757 = vmatprep.subr.mxu0 0.0
        %758 = vmatpush1.msra.mxu0 0.0
        %759 = vmatprep.subr.mxu0 0.0
        %760 = vmatpush1.msra.mxu0 0.0
        %761 = vmatprep.subr.mxu0 0.0
        %762 = vmatpush1.msra.mxu0 0.0
        %763 = vmatprep.subr.mxu0 0.0
        %764 = vmatpush1.msra.mxu0 0.0
        %765 = vmatprep.subr.mxu0 0.0
        %766 = vmatpush1.msra.mxu0 0.0
        %767 = vmatprep.subr.mxu0 0.0
        %768 = vmatpush1.msra.mxu0 0.0
        %769 = vmatprep.subr.mxu0 0.0
        %770 = vmatpush1.msra.mxu0 0.0
        %771 = vmatprep.subr.mxu0 0.0
        %772 = vmatpush1.msra.mxu0 0.0
        %773 = vmatprep.subr.mxu0 0.0
        %774 = vmatpush1.msra.mxu0 0.0
        %775 = vmatprep.subr.mxu0 0.0
        %776 = vmatpush1.msra.mxu0 0.0
        %777 = vmatprep.subr.mxu0 0.0
        %778 = vmatpush1.msra.mxu0 0.0
        %779 = vmatprep.subr.mxu0 0.0
        %780 = vmatpush1.msra.mxu0 0.0
        %781 = vmatprep.subr.mxu0 0.0
        %782 = vmatpush1.msra.mxu0 0.0
        %783 = vmatprep.subr.mxu0 0.0
        %784 = vmatpush1.msra.mxu0 0.0
        %785 = vmatprep.subr.mxu0 0.0
        %786 = vmatpush1.msra.mxu0 0.0
        %787 = vmatprep.subr.mxu0 0.0
        %788 = vmatpush1.msra.mxu0 0.0
        %789 = vmatprep.subr.mxu0 0.0
        %790 = vmatpush1.msra.mxu0 0.0
        %791 = vmatprep.subr.mxu0 0.0
        %792 = vmatpush1.msra.mxu0 0.0
        %793 = vmatprep.subr.mxu0 0.0
        %794 = vmatpush1.msra.mxu0 0.0
        %795 = vmatprep.subr.mxu0 0.0
        %796 = vmatpush1.msra.mxu0 0.0
        %797 = vmatprep.subr.mxu0 0.0
        %798 = vmatpush1.msra.mxu0 0.0
        %799 = vmatprep.subr.mxu0 0.0
        %800 = vmatpush1.msra.mxu0 0.0
        %801 = vmatprep.subr.mxu0 0.0
        %802 = vmatpush1.msra.mxu0 0.0
        %803 = vmatprep.subr.mxu0 0.0
        %804 = vmatpush1.msra.mxu0 0.0
        %805 = vmatprep.subr.mxu0 0.0
        %806 = vmatpush1.msra.mxu0 0.0
        %807 = vmatprep.subr.mxu0 0.0
        %808 = vmatpush1.msra.mxu0 0.0
        %809 = vmatprep.subr.mxu0 0.0
        %810 = vmatpush1.msra.mxu0 0.0
        %811 = vmatprep.mubr.f32.mxu0 0.0
        %812 = vmatmul.mubr.f32.gmra.mrb[0].mxu0 %v611
        %v813 = vpop.f32.mrb[0].mxu0
        %v814 = vadd.f32 0.0, %v813
        %v815 = vpop.f32.mrb[0].mxu0
        %v816 = vadd.f32 0.0, %v815
        %817 = vmatprep.mubr.f32.mxu0 0.0
        %818 = vmatmul.mubr.f32.gmra.mrb[0].mxu0 %v614
        %v819 = vpop.f32.mrb[0].mxu0
        %v820 = vadd.f32 0.0, %v819
        %v821 = vpop.f32.mrb[0].mxu0
        %v822 = vadd.f32 0.0, %v821
        %823 = vmatprep.mubr.f32.mxu0 0.0
        %824 = vmatmul.mubr.f32.gmra.mrb[0].mxu0 %v617
        %v825 = vpop.f32.mrb[0].mxu0
        %v826 = vadd.f32 0.0, %v825
        %v827 = vpop.f32.mrb[0].mxu0
        %v828 = vadd.f32 0.0, %v827
        %829 = vmatprep.mubr.f32.mxu0 0.0
        %830 = vmatmul.mubr.f32.gmra.mrb[0].mxu0 %v620
        %v831 = vpop.f32.mrb[0].mxu0
        %v832 = vadd.f32 0.0, %v831
        %v833 = vpop.f32.mrb[0].mxu0
        %v834 = vadd.f32 0.0, %v833
        %835 = vmatprep.mubr.f32.mxu0 0.0
        %836 = vmatmul.mubr.f32.gmra.mrb[0].mxu0 %v623
        %v837 = vpop.f32.mrb[0].mxu0
        %v838 = vadd.f32 0.0, %v837
        %v839 = vpop.f32.mrb[0].mxu0
        %v840 = vadd.f32 0.0, %v839
        %841 = vmatprep.mubr.f32.mxu0 0.0
        %842 = vmatmul.mubr.f32.gmra.mrb[0].mxu0 %v626
        %v843 = vpop.f32.mrb[0].mxu0
        %v844 = vadd.f32 0.0, %v843
        %v845 = vpop.f32.mrb[0].mxu0
        %v846 = vadd.f32 0.0, %v845
        %847 = vmatprep.mubr.f32.mxu0 0.0
        %848 = vmatmul.mubr.f32.gmra.mrb[0].mxu0 %v629
        %v849 = vpop.f32.mrb[0].mxu0
        %v850 = vadd.f32 0.0, %v849
        %v851 = vpop.f32.mrb[0].mxu0
        %v852 = vadd.f32 0.0, %v851
        %853 = vmatprep.mubr.f32.mxu0 0.0
        %854 = vmatmul.mubr.f32.gmra.mrb[0].mxu0 %v632
        %v855 = vpop.f32.mrb[0].mxu0
        %v856 = vadd.f32 0.0, %v855
        %v857 = vpop.f32.mrb[0].mxu0
        %v858 = vadd.f32 0.0, %v857
        %859 = vdwg.mxu0
        %860 = vmatprep.subr.mxu0 %v382
        %861 = vmatpush1.msra.mxu0 %v381
        %862 = vmatprep.subr.mxu0 %v390
        %863 = vmatpush1.msra.mxu0 %v389
        %864 = vmatprep.subr.mxu0 0.0
        %865 = vmatpush1.msra.mxu0 0.0
        %866 = vmatprep.subr.mxu0 0.0
        %867 = vmatpush1.msra.mxu0 0.0
        %868 = vmatprep.subr.mxu0 0.0
        %869 = vmatpush1.msra.mxu0 0.0
        %870 = vmatprep.subr.mxu0 0.0
        %871 = vmatpush1.msra.mxu0 0.0
        %872 = vmatprep.subr.mxu0 0.0
        %873 = vmatpush1.msra.mxu0 0.0
        %874 = vmatprep.subr.mxu0 0.0
        %875 = vmatpush1.msra.mxu0 0.0
        %876 = vmatprep.subr.mxu0 0.0
        %877 = vmatpush1.msra.mxu0 0.0
        %878 = vmatprep.subr.mxu0 0.0
        %879 = vmatpush1.msra.mxu0 0.0
        %880 = vmatprep.subr.mxu0 0.0
        %881 = vmatpush1.msra.mxu0 0.0
        %882 = vmatprep.subr.mxu0 0.0
        %883 = vmatpush1.msra.mxu0 0.0
        %884 = vmatprep.subr.mxu0 0.0
        %885 = vmatpush1.msra.mxu0 0.0
        %886 = vmatprep.subr.mxu0 0.0
        %887 = vmatpush1.msra.mxu0 0.0
        %888 = vmatprep.subr.mxu0 0.0
        %889 = vmatpush1.msra.mxu0 0.0
        %890 = vmatprep.subr.mxu0 0.0
        %891 = vmatpush1.msra.mxu0 0.0
        %892 = vmatprep.subr.mxu0 0.0
        %893 = vmatpush1.msra.mxu0 0.0
        %894 = vmatprep.subr.mxu0 0.0
        %895 = vmatpush1.msra.mxu0 0.0
        %896 = vmatprep.subr.mxu0 0.0
        %897 = vmatpush1.msra.mxu0 0.0
        %898 = vmatprep.subr.mxu0 0.0
        %899 = vmatpush1.msra.mxu0 0.0
        %900 = vmatprep.subr.mxu0 0.0
        %901 = vmatpush1.msra.mxu0 0.0
        %902 = vmatprep.subr.mxu0 0.0
        %903 = vmatpush1.msra.mxu0 0.0
        %904 = vmatprep.subr.mxu0 0.0
        %905 = vmatpush1.msra.mxu0 0.0
        %906 = vmatprep.subr.mxu0 0.0
        %907 = vmatpush1.msra.mxu0 0.0
        %908 = vmatprep.subr.mxu0 0.0
        %909 = vmatpush1.msra.mxu0 0.0
        %910 = vmatprep.subr.mxu0 0.0
        %911 = vmatpush1.msra.mxu0 0.0
        %912 = vmatprep.subr.mxu0 0.0
        %913 = vmatpush1.msra.mxu0 0.0
        %914 = vmatprep.subr.mxu0 0.0
        %915 = vmatpush1.msra.mxu0 0.0
        %916 = vmatprep.subr.mxu0 0.0
        %917 = vmatpush1.msra.mxu0 0.0
        %918 = vmatprep.subr.mxu0 0.0
        %919 = vmatpush1.msra.mxu0 0.0
        %920 = vmatprep.subr.mxu0 0.0
        %921 = vmatpush1.msra.mxu0 0.0
        %922 = vmatprep.subr.mxu0 0.0
        %923 = vmatpush1.msra.mxu0 0.0
        %924 = vmatprep.mubr.f32.mxu0 0.0
        %925 = vmatmul.mubr.f32.gmra.mrb[0].mxu0 %v611
        %v926 = vpop.f32.mrb[0].mxu0
        %v927 = vadd.f32 0.0, %v926
        %v928 = vpop.f32.mrb[0].mxu0
        %v929 = vadd.f32 0.0, %v928
        %930 = vmatprep.mubr.f32.mxu0 0.0
        %931 = vmatmul.mubr.f32.gmra.mrb[0].mxu0 %v614
        %v932 = vpop.f32.mrb[0].mxu0
        %v933 = vadd.f32 0.0, %v932
        %v934 = vpop.f32.mrb[0].mxu0
        %v935 = vadd.f32 0.0, %v934
        %936 = vmatprep.mubr.f32.mxu0 0.0
        %937 = vmatmul.mubr.f32.gmra.mrb[0].mxu0 %v617
        %v938 = vpop.f32.mrb[0].mxu0
        %v939 = vadd.f32 0.0, %v938
        %v940 = vpop.f32.mrb[0].mxu0
        %v941 = vadd.f32 0.0, %v940
        %942 = vmatprep.mubr.f32.mxu0 0.0
        %943 = vmatmul.mubr.f32.gmra.mrb[0].mxu0 %v620
        %v944 = vpop.f32.mrb[0].mxu0
        %v945 = vadd.f32 0.0, %v944
        %v946 = vpop.f32.mrb[0].mxu0
        %v947 = vadd.f32 0.0, %v946
        %948 = vmatprep.mubr.f32.mxu0 0.0
        %949 = vmatmul.mubr.f32.gmra.mrb[0].mxu0 %v623
        %v950 = vpop.f32.mrb[0].mxu0
        %v951 = vadd.f32 0.0, %v950
        %v952 = vpop.f32.mrb[0].mxu0
        %v953 = vadd.f32 0.0, %v952
        %954 = vmatprep.mubr.f32.mxu0 0.0
        %955 = vmatmul.mubr.f32.gmra.mrb[0].mxu0 %v626
        %v956 = vpop.f32.mrb[0].mxu0
        %v957 = vadd.f32 0.0, %v956
        %v958 = vpop.f32.mrb[0].mxu0
        %v959 = vadd.f32 0.0, %v958
        %960 = vmatprep.mubr.f32.mxu0 0.0
        %961 = vmatmul.mubr.f32.gmra.mrb[0].mxu0 %v629
        %v962 = vpop.f32.mrb[0].mxu0
        %v963 = vadd.f32 0.0, %v962
        %v964 = vpop.f32.mrb[0].mxu0
        %v965 = vadd.f32 0.0, %v964
        %966 = vmatprep.mubr.f32.mxu0 0.0
        %967 = vmatmul.mubr.f32.gmra.mrb[0].mxu0 %v632
        %v968 = vpop.f32.mrb[0].mxu0
        %v969 = vadd.f32 0.0, %v968
        %v970 = vpop.f32.mrb[0].mxu0
        %v971 = vadd.f32 0.0, %v970
        %972 = vdwg.mxu0
        %973 = vmatprep.subr.mxu0 %v384
        %974 = vmatpush1.msra.mxu0 %v383
        %975 = vmatprep.subr.mxu0 %v392
        %976 = vmatpush1.msra.mxu0 %v391
        %977 = vmatprep.subr.mxu0 0.0
        %978 = vmatpush1.msra.mxu0 0.0
        %979 = vmatprep.subr.mxu0 0.0
        %980 = vmatpush1.msra.mxu0 0.0
        %981 = vmatprep.subr.mxu0 0.0
        %982 = vmatpush1.msra.mxu0 0.0
        %983 = vmatprep.subr.mxu0 0.0
        %984 = vmatpush1.msra.mxu0 0.0
        %985 = vmatprep.subr.mxu0 0.0
        %986 = vmatpush1.msra.mxu0 0.0
        %987 = vmatprep.subr.mxu0 0.0
        %988 = vmatpush1.msra.mxu0 0.0
        %989 = vmatprep.subr.mxu0 0.0
        %990 = vmatpush1.msra.mxu0 0.0
        %991 = vmatprep.subr.mxu0 0.0
        %992 = vmatpush1.msra.mxu0 0.0
        %993 = vmatprep.subr.mxu0 0.0
        %994 = vmatpush1.msra.mxu0 0.0
        %995 = vmatprep.subr.mxu0 0.0
        %996 = vmatpush1.msra.mxu0 0.0
        %997 = vmatprep.subr.mxu0 0.0
        %998 = vmatpush1.msra.mxu0 0.0
        %999 = vmatprep.subr.mxu0 0.0
        %1000 = vmatpush1.msra.mxu0 0.0
        %1001 = vmatprep.subr.mxu0 0.0
        %1002 = vmatpush1.msra.mxu0 0.0
        %1003 = vmatprep.subr.mxu0 0.0
        %1004 = vmatpush1.msra.mxu0 0.0
        %1005 = vmatprep.subr.mxu0 0.0
        %1006 = vmatpush1.msra.mxu0 0.0
        %1007 = vmatprep.subr.mxu0 0.0
        %1008 = vmatpush1.msra.mxu0 0.0
        %1009 = vmatprep.subr.mxu0 0.0
        %1010 = vmatpush1.msra.mxu0 0.0
        %1011 = vmatprep.subr.mxu0 0.0
        %1012 = vmatpush1.msra.mxu0 0.0
        %1013 = vmatprep.subr.mxu0 0.0
        %1014 = vmatpush1.msra.mxu0 0.0
        %1015 = vmatprep.subr.mxu0 0.0
        %1016 = vmatpush1.msra.mxu0 0.0
        %1017 = vmatprep.subr.mxu0 0.0
        %1018 = vmatpush1.msra.mxu0 0.0
        %1019 = vmatprep.subr.mxu0 0.0
        %1020 = vmatpush1.msra.mxu0 0.0
        %1021 = vmatprep.subr.mxu0 0.0
        %1022 = vmatpush1.msra.mxu0 0.0
        %1023 = vmatprep.subr.mxu0 0.0
        %1024 = vmatpush1.msra.mxu0 0.0
        %1025 = vmatprep.subr.mxu0 0.0
        %1026 = vmatpush1.msra.mxu0 0.0
        %1027 = vmatprep.subr.mxu0 0.0
        %1028 = vmatpush1.msra.mxu0 0.0
        %1029 = vmatprep.subr.mxu0 0.0
        %1030 = vmatpush1.msra.mxu0 0.0
        %1031 = vmatprep.subr.mxu0 0.0
        %1032 = vmatpush1.msra.mxu0 0.0
        %1033 = vmatprep.subr.mxu0 0.0
        %1034 = vmatpush1.msra.mxu0 0.0
        %1035 = vmatprep.subr.mxu0 0.0
        %1036 = vmatpush1.msra.mxu0 0.0
        %1037 = vmatprep.mubr.f32.mxu0 0.0
        %1038 = vmatmul.mubr.f32.gmra.mrb[0].mxu0 %v611
        %v1039 = vpop.f32.mrb[0].mxu0
        %v1040 = vadd.f32 0.0, %v1039
        %v1041 = vpop.f32.mrb[0].mxu0
        %v1042 = vadd.f32 0.0, %v1041
        %1043 = vmatprep.mubr.f32.mxu0 0.0
        %1044 = vmatmul.mubr.f32.gmra.mrb[0].mxu0 %v614
        %v1045 = vpop.f32.mrb[0].mxu0
        %v1046 = vadd.f32 0.0, %v1045
        %v1047 = vpop.f32.mrb[0].mxu0
        %v1048 = vadd.f32 0.0, %v1047
        %1049 = vmatprep.mubr.f32.mxu0 0.0
        %1050 = vmatmul.mubr.f32.gmra.mrb[0].mxu0 %v617
        %v1051 = vpop.f32.mrb[0].mxu0
        %v1052 = vadd.f32 0.0, %v1051
        %v1053 = vpop.f32.mrb[0].mxu0
        %v1054 = vadd.f32 0.0, %v1053
        %1055 = vmatprep.mubr.f32.mxu0 0.0
        %1056 = vmatmul.mubr.f32.gmra.mrb[0].mxu0 %v620
        %v1057 = vpop.f32.mrb[0].mxu0
        %v1058 = vadd.f32 0.0, %v1057
        %v1059 = vpop.f32.mrb[0].mxu0
        %v1060 = vadd.f32 0.0, %v1059
        %1061 = vmatprep.mubr.f32.mxu0 0.0
        %1062 = vmatmul.mubr.f32.gmra.mrb[0].mxu0 %v623
        %v1063 = vpop.f32.mrb[0].mxu0
        %v1064 = vadd.f32 0.0, %v1063
        %v1065 = vpop.f32.mrb[0].mxu0
        %v1066 = vadd.f32 0.0, %v1065
        %1067 = vmatprep.mubr.f32.mxu0 0.0
        %1068 = vmatmul.mubr.f32.gmra.mrb[0].mxu0 %v626
        %v1069 = vpop.f32.mrb[0].mxu0
        %v1070 = vadd.f32 0.0, %v1069
        %v1071 = vpop.f32.mrb[0].mxu0
        %v1072 = vadd.f32 0.0, %v1071
        %1073 = vmatprep.mubr.f32.mxu0 0.0
        %1074 = vmatmul.mubr.f32.gmra.mrb[0].mxu0 %v629
        %v1075 = vpop.f32.mrb[0].mxu0
        %v1076 = vadd.f32 0.0, %v1075
        %v1077 = vpop.f32.mrb[0].mxu0
        %v1078 = vadd.f32 0.0, %v1077
        %1079 = vmatprep.mubr.f32.mxu0 0.0
        %1080 = vmatmul.mubr.f32.gmra.mrb[0].mxu0 %v632
        %v1081 = vpop.f32.mrb[0].mxu0
        %v1082 = vadd.f32 0.0, %v1081
        %v1083 = vpop.f32.mrb[0].mxu0
        %v1084 = vadd.f32 0.0, %v1083
        %1085 = vdwg.mxu0
        %v1086 = vmul.f32 %v701, %v585
        %v1087 = vmul.f32 %v703, %v586
        %v1088 = vmul.f32 %v814, %v587
        %v1089 = vmul.f32 %v816, %v588
        %v1090 = vmul.f32 %v927, %v589
        %v1091 = vmul.f32 %v929, %v590
        %v1092 = vmul.f32 %v1040, %v591
        %v1093 = vmul.f32 %v1042, %v592
        %v1094 = vmul.f32 %v707, %v593
        %v1095 = vmul.f32 %v709, %v594
        %v1096 = vmul.f32 %v820, %v595
        %v1097 = vmul.f32 %v822, %v596
        %v1098 = vmul.f32 %v933, %v597
        %v1099 = vmul.f32 %v935, %v598
        %v1100 = vmul.f32 %v1046, %v599
        %v1101 = vmul.f32 %v1048, %v600
        %v1102 = vadd.f32 %v1086, %v1094
        %v1103 = vrot.slane %v1102, 4
        %v1104 = vadd.f32 %v1102, %v1103
        %v1105 = vrot.slane %v1104, 2
        %v1106 = vadd.f32 %v1104, %v1105
        %v1107 = vrot.slane %v1106, 1
        %v1108 = vadd.f32 %v1106, %v1107
        %v1109 = vadd.f32 %v1087, %v1095
        %v1110 = vrot.slane %v1109, 4
        %v1111 = vadd.f32 %v1109, %v1110
        %v1112 = vrot.slane %v1111, 2
        %v1113 = vadd.f32 %v1111, %v1112
        %v1114 = vrot.slane %v1113, 1
        %v1115 = vadd.f32 %v1113, %v1114
        %v1116 = vadd.f32 %v1088, %v1096
        %v1117 = vrot.slane %v1116, 4
        %v1118 = vadd.f32 %v1116, %v1117
        %v1119 = vrot.slane %v1118, 2
        %v1120 = vadd.f32 %v1118, %v1119
        %v1121 = vrot.slane %v1120, 1
        %v1122 = vadd.f32 %v1120, %v1121
        %v1123 = vadd.f32 %v1089, %v1097
        %v1124 = vrot.slane %v1123, 4
        %v1125 = vadd.f32 %v1123, %v1124
        %v1126 = vrot.slane %v1125, 2
        %v1127 = vadd.f32 %v1125, %v1126
        %v1128 = vrot.slane %v1127, 1
        %v1129 = vadd.f32 %v1127, %v1128
        %v1130 = vadd.f32 %v1090, %v1098
        %v1131 = vrot.slane %v1130, 4
        %v1132 = vadd.f32 %v1130, %v1131
        %v1133 = vrot.slane %v1132, 2
        %v1134 = vadd.f32 %v1132, %v1133
        %v1135 = vrot.slane %v1134, 1
        %v1136 = vadd.f32 %v1134, %v1135
        %v1137 = vadd.f32 %v1091, %v1099
        %v1138 = vrot.slane %v1137, 4
        %v1139 = vadd.f32 %v1137, %v1138
        %v1140 = vrot.slane %v1139, 2
        %v1141 = vadd.f32 %v1139, %v1140
        %v1142 = vrot.slane %v1141, 1
        %v1143 = vadd.f32 %v1141, %v1142
        %v1144 = vadd.f32 %v1092, %v1100
        %v1145 = vrot.slane %v1144, 4
        %v1146 = vadd.f32 %v1144, %v1145
        %v1147 = vrot.slane %v1146, 2
        %v1148 = vadd.f32 %v1146, %v1147
        %v1149 = vrot.slane %v1148, 1
        %v1150 = vadd.f32 %v1148, %v1149
        %v1151 = vadd.f32 %v1093, %v1101
        %v1152 = vrot.slane %v1151, 4
        %v1153 = vadd.f32 %v1151, %v1152
        %v1154 = vrot.slane %v1153, 2
        %v1155 = vadd.f32 %v1153, %v1154
        %v1156 = vrot.slane %v1155, 1
        %v1157 = vadd.f32 %v1155, %v1156
        %v1158 = vmul.f32 %v713, %v585
        %v1159 = vmul.f32 %v715, %v586
        %v1160 = vmul.f32 %v826, %v587
        %v1161 = vmul.f32 %v828, %v588
        %v1162 = vmul.f32 %v939, %v589
        %v1163 = vmul.f32 %v941, %v590
        %v1164 = vmul.f32 %v1052, %v591
        %v1165 = vmul.f32 %v1054, %v592
        %v1166 = vmul.f32 %v719, %v593
        %v1167 = vmul.f32 %v721, %v594
        %v1168 = vmul.f32 %v832, %v595
        %v1169 = vmul.f32 %v834, %v596
        %v1170 = vmul.f32 %v945, %v597
        %v1171 = vmul.f32 %v947, %v598
        %v1172 = vmul.f32 %v1058, %v599
        %v1173 = vmul.f32 %v1060, %v600
        %v1174 = vadd.f32 %v1158, %v1166
        %v1175 = vrot.slane %v1174, 4
        %v1176 = vadd.f32 %v1174, %v1175
        %v1177 = vrot.slane %v1176, 2
        %v1178 = vadd.f32 %v1176, %v1177
        %v1179 = vrot.slane %v1178, 1
        %v1180 = vadd.f32 %v1178, %v1179
        %v1181 = vadd.f32 %v1159, %v1167
        %v1182 = vrot.slane %v1181, 4
        %v1183 = vadd.f32 %v1181, %v1182
        %v1184 = vrot.slane %v1183, 2
        %v1185 = vadd.f32 %v1183, %v1184
        %v1186 = vrot.slane %v1185, 1
        %v1187 = vadd.f32 %v1185, %v1186
        %v1188 = vadd.f32 %v1160, %v1168
        %v1189 = vrot.slane %v1188, 4
        %v1190 = vadd.f32 %v1188, %v1189
        %v1191 = vrot.slane %v1190, 2
        %v1192 = vadd.f32 %v1190, %v1191
        %v1193 = vrot.slane %v1192, 1
        %v1194 = vadd.f32 %v1192, %v1193
        %v1195 = vadd.f32 %v1161, %v1169
        %v1196 = vrot.slane %v1195, 4
        %v1197 = vadd.f32 %v1195, %v1196
        %v1198 = vrot.slane %v1197, 2
        %v1199 = vadd.f32 %v1197, %v1198
        %v1200 = vrot.slane %v1199, 1
        %v1201 = vadd.f32 %v1199, %v1200
        %v1202 = vadd.f32 %v1162, %v1170
        %v1203 = vrot.slane %v1202, 4
        %v1204 = vadd.f32 %v1202, %v1203
        %v1205 = vrot.slane %v1204, 2
        %v1206 = vadd.f32 %v1204, %v1205
        %v1207 = vrot.slane %v1206, 1
        %v1208 = vadd.f32 %v1206, %v1207
        %v1209 = vadd.f32 %v1163, %v1171
        %v1210 = vrot.slane %v1209, 4
        %v1211 = vadd.f32 %v1209, %v1210
        %v1212 = vrot.slane %v1211, 2
        %v1213 = vadd.f32 %v1211, %v1212
        %v1214 = vrot.slane %v1213, 1
        %v1215 = vadd.f32 %v1213, %v1214
        %v1216 = vadd.f32 %v1164, %v1172
        %v1217 = vrot.slane %v1216, 4
        %v1218 = vadd.f32 %v1216, %v1217
        %v1219 = vrot.slane %v1218, 2
        %v1220 = vadd.f32 %v1218, %v1219
        %v1221 = vrot.slane %v1220, 1
        %v1222 = vadd.f32 %v1220, %v1221
        %v1223 = vadd.f32 %v1165, %v1173
        %v1224 = vrot.slane %v1223, 4
        %v1225 = vadd.f32 %v1223, %v1224
        %v1226 = vrot.slane %v1225, 2
        %v1227 = vadd.f32 %v1225, %v1226
        %v1228 = vrot.slane %v1227, 1
        %v1229 = vadd.f32 %v1227, %v1228
        %v1230 = vmul.f32 %v725, %v585
        %v1231 = vmul.f32 %v727, %v586
        %v1232 = vmul.f32 %v838, %v587
        %v1233 = vmul.f32 %v840, %v588
        %v1234 = vmul.f32 %v951, %v589
        %v1235 = vmul.f32 %v953, %v590
        %v1236 = vmul.f32 %v1064, %v591
        %v1237 = vmul.f32 %v1066, %v592
        %v1238 = vmul.f32 %v731, %v593
        %v1239 = vmul.f32 %v733, %v594
        %v1240 = vmul.f32 %v844, %v595
        %v1241 = vmul.f32 %v846, %v596
        %v1242 = vmul.f32 %v957, %v597
        %v1243 = vmul.f32 %v959, %v598
        %v1244 = vmul.f32 %v1070, %v599
        %v1245 = vmul.f32 %v1072, %v600
        %v1246 = vadd.f32 %v1230, %v1238
        %v1247 = vrot.slane %v1246, 4
        %v1248 = vadd.f32 %v1246, %v1247
        %v1249 = vrot.slane %v1248, 2
        %v1250 = vadd.f32 %v1248, %v1249
        %v1251 = vrot.slane %v1250, 1
        %v1252 = vadd.f32 %v1250, %v1251
        %v1253 = vadd.f32 %v1231, %v1239
        %v1254 = vrot.slane %v1253, 4
        %v1255 = vadd.f32 %v1253, %v1254
        %v1256 = vrot.slane %v1255, 2
        %v1257 = vadd.f32 %v1255, %v1256
        %v1258 = vrot.slane %v1257, 1
        %v1259 = vadd.f32 %v1257, %v1258
        %v1260 = vadd.f32 %v1232, %v1240
        %v1261 = vrot.slane %v1260, 4
        %v1262 = vadd.f32 %v1260, %v1261
        %v1263 = vrot.slane %v1262, 2
        %v1264 = vadd.f32 %v1262, %v1263
        %v1265 = vrot.slane %v1264, 1
        %v1266 = vadd.f32 %v1264, %v1265
        %v1267 = vadd.f32 %v1233, %v1241
        %v1268 = vrot.slane %v1267, 4
        %v1269 = vadd.f32 %v1267, %v1268
        %v1270 = vrot.slane %v1269, 2
        %v1271 = vadd.f32 %v1269, %v1270
        %v1272 = vrot.slane %v1271, 1
        %v1273 = vadd.f32 %v1271, %v1272
        %v1274 = vadd.f32 %v1234, %v1242
        %v1275 = vrot.slane %v1274, 4
        %v1276 = vadd.f32 %v1274, %v1275
        %v1277 = vrot.slane %v1276, 2
        %v1278 = vadd.f32 %v1276, %v1277
        %v1279 = vrot.slane %v1278, 1
        %v1280 = vadd.f32 %v1278, %v1279
        %v1281 = vadd.f32 %v1235, %v1243
        %v1282 = vrot.slane %v1281, 4
        %v1283 = vadd.f32 %v1281, %v1282
        %v1284 = vrot.slane %v1283, 2
        %v1285 = vadd.f32 %v1283, %v1284
        %v1286 = vrot.slane %v1285, 1
        %v1287 = vadd.f32 %v1285, %v1286
        %v1288 = vadd.f32 %v1236, %v1244
        %v1289 = vrot.slane %v1288, 4
        %v1290 = vadd.f32 %v1288, %v1289
        %v1291 = vrot.slane %v1290, 2
        %v1292 = vadd.f32 %v1290, %v1291
        %v1293 = vrot.slane %v1292, 1
        %v1294 = vadd.f32 %v1292, %v1293
        %v1295 = vadd.f32 %v1237, %v1245
        %v1296 = vrot.slane %v1295, 4
        %v1297 = vadd.f32 %v1295, %v1296
        %v1298 = vrot.slane %v1297, 2
        %v1299 = vadd.f32 %v1297, %v1298
        %v1300 = vrot.slane %v1299, 1
        %v1301 = vadd.f32 %v1299, %v1300
        %v1302 = vmul.f32 %v737, %v585
        %v1303 = vmul.f32 %v739, %v586
        %v1304 = vmul.f32 %v850, %v587
        %v1305 = vmul.f32 %v852, %v588
        %v1306 = vmul.f32 %v963, %v589
        %v1307 = vmul.f32 %v965, %v590
        %v1308 = vmul.f32 %v1076, %v591
        %v1309 = vmul.f32 %v1078, %v592
        %v1310 = vmul.f32 %v743, %v593
        %v1311 = vmul.f32 %v745, %v594
        %v1312 = vmul.f32 %v856, %v595
        %v1313 = vmul.f32 %v858, %v596
        %v1314 = vmul.f32 %v969, %v597
        %v1315 = vmul.f32 %v971, %v598
        %v1316 = vmul.f32 %v1082, %v599
        %v1317 = vmul.f32 %v1084, %v600
        %v1318 = vadd.f32 %v1302, %v1310
        %v1319 = vrot.slane %v1318, 4
        %v1320 = vadd.f32 %v1318, %v1319
        %v1321 = vrot.slane %v1320, 2
        %v1322 = vadd.f32 %v1320, %v1321
        %v1323 = vrot.slane %v1322, 1
        %v1324 = vadd.f32 %v1322, %v1323
        %v1325 = vadd.f32 %v1303, %v1311
        %v1326 = vrot.slane %v1325, 4
        %v1327 = vadd.f32 %v1325, %v1326
        %v1328 = vrot.slane %v1327, 2
        %v1329 = vadd.f32 %v1327, %v1328
        %v1330 = vrot.slane %v1329, 1
        %v1331 = vadd.f32 %v1329, %v1330
        %v1332 = vadd.f32 %v1304, %v1312
        %v1333 = vrot.slane %v1332, 4
        %v1334 = vadd.f32 %v1332, %v1333
        %v1335 = vrot.slane %v1334, 2
        %v1336 = vadd.f32 %v1334, %v1335
        %v1337 = vrot.slane %v1336, 1
        %v1338 = vadd.f32 %v1336, %v1337
        %v1339 = vadd.f32 %v1305, %v1313
        %v1340 = vrot.slane %v1339, 4
        %v1341 = vadd.f32 %v1339, %v1340
        %v1342 = vrot.slane %v1341, 2
        %v1343 = vadd.f32 %v1341, %v1342
        %v1344 = vrot.slane %v1343, 1
        %v1345 = vadd.f32 %v1343, %v1344
        %v1346 = vadd.f32 %v1306, %v1314
        %v1347 = vrot.slane %v1346, 4
        %v1348 = vadd.f32 %v1346, %v1347
        %v1349 = vrot.slane %v1348, 2
        %v1350 = vadd.f32 %v1348, %v1349
        %v1351 = vrot.slane %v1350, 1
        %v1352 = vadd.f32 %v1350, %v1351
        %v1353 = vadd.f32 %v1307, %v1315
        %v1354 = vrot.slane %v1353, 4
        %v1355 = vadd.f32 %v1353, %v1354
        %v1356 = vrot.slane %v1355, 2
        %v1357 = vadd.f32 %v1355, %v1356
        %v1358 = vrot.slane %v1357, 1
        %v1359 = vadd.f32 %v1357, %v1358
        %v1360 = vadd.f32 %v1308, %v1316
        %v1361 = vrot.slane %v1360, 4
        %v1362 = vadd.f32 %v1360, %v1361
        %v1363 = vrot.slane %v1362, 2
        %v1364 = vadd.f32 %v1362, %v1363
        %v1365 = vrot.slane %v1364, 1
        %v1366 = vadd.f32 %v1364, %v1365
        %v1367 = vadd.f32 %v1309, %v1317
        %v1368 = vrot.slane %v1367, 4
        %v1369 = vadd.f32 %v1367, %v1368
        %v1370 = vrot.slane %v1369, 2
        %v1371 = vadd.f32 %v1369, %v1370
        %v1372 = vrot.slane %v1371, 1
        %v1373 = vadd.f32 %v1371, %v1372
        %s1374 = scalar_lea.vmem %s163, 64
        %v1375 = vld [vmem:[%s1374] sm:$0xff]
        %v1376 = vld [vmem:[%s1374 + $0x8] sm:$0xff]
        %v1377 = vld [vmem:[%s1374 + $0x10] sm:$0xff]
        %v1378 = vld [vmem:[%s1374 + $0x18] sm:$0xff]
        %v1379 = vld [vmem:[%s1374 + $0x20] sm:$0xff]
        %v1380 = vld [vmem:[%s1374 + $0x28] sm:$0xff]
        %v1381 = vld [vmem:[%s1374 + $0x30] sm:$0xff]
        %v1382 = vld [vmem:[%s1374 + $0x38] sm:$0xff]
        %v1383 = vlaneseq
        %v1384 = vshrl.u32 %v1383, 7
        %v1385 = vsub.s32 0, %v1384
        %v1386 = vrot.slane %v1375, %v1385
        %v1387 = vlaneseq
        %v1388 = vshrl.u32 %v1387, 7
        %v1389 = vsub.s32 0, %v1388
        %v1390 = vrot.slane %v1376, %v1389
        %v1391 = vlaneseq
        %v1392 = vshrl.u32 %v1391, 7
        %v1393 = vsub.s32 0, %v1392
        %v1394 = vrot.slane %v1377, %v1393
        %v1395 = vlaneseq
        %v1396 = vshrl.u32 %v1395, 7
        %v1397 = vsub.s32 0, %v1396
        %v1398 = vrot.slane %v1378, %v1397
        %v1399 = vlaneseq
        %v1400 = vshrl.u32 %v1399, 7
        %v1401 = vsub.s32 0, %v1400
        %v1402 = vrot.slane %v1379, %v1401
        %v1403 = vlaneseq
        %v1404 = vshrl.u32 %v1403, 7
        %v1405 = vsub.s32 0, %v1404
        %v1406 = vrot.slane %v1380, %v1405
        %v1407 = vlaneseq
        %v1408 = vshrl.u32 %v1407, 7
        %v1409 = vsub.s32 0, %v1408
        %v1410 = vrot.slane %v1381, %v1409
        %v1411 = vlaneseq
        %v1412 = vshrl.u32 %v1411, 7
        %v1413 = vsub.s32 0, %v1412
        %v1414 = vrot.slane %v1382, %v1413
        %vm1415 = vcmp.eq.f32.partialorder %v175, %v1386
        %vm1416 = vcmp.eq.f32.partialorder %v175, %v1390
        %vm1417 = vcmp.eq.f32.partialorder %v175, %v1394
        %vm1418 = vcmp.eq.f32.partialorder %v175, %v1398
        %vm1419 = vcmp.eq.f32.partialorder %v175, %v1402
        %vm1420 = vcmp.eq.f32.partialorder %v175, %v1406
        %vm1421 = vcmp.eq.f32.partialorder %v175, %v1410
        %vm1422 = vcmp.eq.f32.partialorder %v175, %v1414
        %vm1423 = vcmp.eq.f32.partialorder %v176, %v1386
        %vm1424 = vcmp.eq.f32.partialorder %v176, %v1390
        %vm1425 = vcmp.eq.f32.partialorder %v176, %v1394
        %vm1426 = vcmp.eq.f32.partialorder %v176, %v1398
        %vm1427 = vcmp.eq.f32.partialorder %v176, %v1402
        %vm1428 = vcmp.eq.f32.partialorder %v176, %v1406
        %vm1429 = vcmp.eq.f32.partialorder %v176, %v1410
        %vm1430 = vcmp.eq.f32.partialorder %v176, %v1414
        %v1431 = vlaneseq
        %v1432 = vshrl.u32 %v1431, 7
        %v1433 = vsub.s32 4, %v1432
        %v1434 = vrot.slane %v1375, %v1433
        %v1435 = vlaneseq
        %v1436 = vshrl.u32 %v1435, 7
        %v1437 = vsub.s32 4, %v1436
        %v1438 = vrot.slane %v1376, %v1437
        %v1439 = vlaneseq
        %v1440 = vshrl.u32 %v1439, 7
        %v1441 = vsub.s32 4, %v1440
        %v1442 = vrot.slane %v1377, %v1441
        %v1443 = vlaneseq
        %v1444 = vshrl.u32 %v1443, 7
        %v1445 = vsub.s32 4, %v1444
        %v1446 = vrot.slane %v1378, %v1445
        %v1447 = vlaneseq
        %v1448 = vshrl.u32 %v1447, 7
        %v1449 = vsub.s32 4, %v1448
        %v1450 = vrot.slane %v1379, %v1449
        %v1451 = vlaneseq
        %v1452 = vshrl.u32 %v1451, 7
        %v1453 = vsub.s32 4, %v1452
        %v1454 = vrot.slane %v1380, %v1453
        %v1455 = vlaneseq
        %v1456 = vshrl.u32 %v1455, 7
        %v1457 = vsub.s32 4, %v1456
        %v1458 = vrot.slane %v1381, %v1457
        %v1459 = vlaneseq
        %v1460 = vshrl.u32 %v1459, 7
        %v1461 = vsub.s32 4, %v1460
        %v1462 = vrot.slane %v1382, %v1461
        %v1463 = vsel %vm1415, %v1434, 0.0
        %v1464 = vsel %vm1416, %v1438, 0.0
        %v1465 = vsel %vm1417, %v1442, 0.0
        %v1466 = vsel %vm1418, %v1446, 0.0
        %v1467 = vsel %vm1419, %v1450, 0.0
        %v1468 = vsel %vm1420, %v1454, 0.0
        %v1469 = vsel %vm1421, %v1458, 0.0
        %v1470 = vsel %vm1422, %v1462, 0.0
        %v1471 = vsel %vm1423, %v1434, 0.0
        %v1472 = vsel %vm1424, %v1438, 0.0
        %v1473 = vsel %vm1425, %v1442, 0.0
        %v1474 = vsel %vm1426, %v1446, 0.0
        %v1475 = vsel %vm1427, %v1450, 0.0
        %v1476 = vsel %vm1428, %v1454, 0.0
        %v1477 = vsel %vm1429, %v1458, 0.0
        %v1478 = vsel %vm1430, %v1462, 0.0
        %v1479 = vlaneseq
        %v1480 = vshrl.u32 %v1479, 7
        %v1481 = vsub.s32 1, %v1480
        %v1482 = vrot.slane %v1375, %v1481
        %v1483 = vlaneseq
        %v1484 = vshrl.u32 %v1483, 7
        %v1485 = vsub.s32 1, %v1484
        %v1486 = vrot.slane %v1376, %v1485
        %v1487 = vlaneseq
        %v1488 = vshrl.u32 %v1487, 7
        %v1489 = vsub.s32 1, %v1488
        %v1490 = vrot.slane %v1377, %v1489
        %v1491 = vlaneseq
        %v1492 = vshrl.u32 %v1491, 7
        %v1493 = vsub.s32 1, %v1492
        %v1494 = vrot.slane %v1378, %v1493
        %v1495 = vlaneseq
        %v1496 = vshrl.u32 %v1495, 7
        %v1497 = vsub.s32 1, %v1496
        %v1498 = vrot.slane %v1379, %v1497
        %v1499 = vlaneseq
        %v1500 = vshrl.u32 %v1499, 7
        %v1501 = vsub.s32 1, %v1500
        %v1502 = vrot.slane %v1380, %v1501
        %v1503 = vlaneseq
        %v1504 = vshrl.u32 %v1503, 7
        %v1505 = vsub.s32 1, %v1504
        %v1506 = vrot.slane %v1381, %v1505
        %v1507 = vlaneseq
        %v1508 = vshrl.u32 %v1507, 7
        %v1509 = vsub.s32 1, %v1508
        %v1510 = vrot.slane %v1382, %v1509
        %vm1511 = vcmp.eq.f32.partialorder %v175, %v1482
        %vm1512 = vcmp.eq.f32.partialorder %v175, %v1486
        %vm1513 = vcmp.eq.f32.partialorder %v175, %v1490
        %vm1514 = vcmp.eq.f32.partialorder %v175, %v1494
        %vm1515 = vcmp.eq.f32.partialorder %v175, %v1498
        %vm1516 = vcmp.eq.f32.partialorder %v175, %v1502
        %vm1517 = vcmp.eq.f32.partialorder %v175, %v1506
        %vm1518 = vcmp.eq.f32.partialorder %v175, %v1510
        %vm1519 = vcmp.eq.f32.partialorder %v176, %v1482
        %vm1520 = vcmp.eq.f32.partialorder %v176, %v1486
        %vm1521 = vcmp.eq.f32.partialorder %v176, %v1490
        %vm1522 = vcmp.eq.f32.partialorder %v176, %v1494
        %vm1523 = vcmp.eq.f32.partialorder %v176, %v1498
        %vm1524 = vcmp.eq.f32.partialorder %v176, %v1502
        %vm1525 = vcmp.eq.f32.partialorder %v176, %v1506
        %vm1526 = vcmp.eq.f32.partialorder %v176, %v1510
        %v1527 = vlaneseq
        %v1528 = vshrl.u32 %v1527, 7
        %v1529 = vsub.s32 5, %v1528
        %v1530 = vrot.slane %v1375, %v1529
        %v1531 = vlaneseq
        %v1532 = vshrl.u32 %v1531, 7
        %v1533 = vsub.s32 5, %v1532
        %v1534 = vrot.slane %v1376, %v1533
        %v1535 = vlaneseq
        %v1536 = vshrl.u32 %v1535, 7
        %v1537 = vsub.s32 5, %v1536
        %v1538 = vrot.slane %v1377, %v1537
        %v1539 = vlaneseq
        %v1540 = vshrl.u32 %v1539, 7
        %v1541 = vsub.s32 5, %v1540
        %v1542 = vrot.slane %v1378, %v1541
        %v1543 = vlaneseq
        %v1544 = vshrl.u32 %v1543, 7
        %v1545 = vsub.s32 5, %v1544
        %v1546 = vrot.slane %v1379, %v1545
        %v1547 = vlaneseq
        %v1548 = vshrl.u32 %v1547, 7
        %v1549 = vsub.s32 5, %v1548
        %v1550 = vrot.slane %v1380, %v1549
        %v1551 = vlaneseq
        %v1552 = vshrl.u32 %v1551, 7
        %v1553 = vsub.s32 5, %v1552
        %v1554 = vrot.slane %v1381, %v1553
        %v1555 = vlaneseq
        %v1556 = vshrl.u32 %v1555, 7
        %v1557 = vsub.s32 5, %v1556
        %v1558 = vrot.slane %v1382, %v1557
        %v1559 = vsel %vm1511, %v1530, 0.0
        %v1560 = vsel %vm1512, %v1534, 0.0
        %v1561 = vsel %vm1513, %v1538, 0.0
        %v1562 = vsel %vm1514, %v1542, 0.0
        %v1563 = vsel %vm1515, %v1546, 0.0
        %v1564 = vsel %vm1516, %v1550, 0.0
        %v1565 = vsel %vm1517, %v1554, 0.0
        %v1566 = vsel %vm1518, %v1558, 0.0
        %v1567 = vsel %vm1519, %v1530, 0.0
        %v1568 = vsel %vm1520, %v1534, 0.0
        %v1569 = vsel %vm1521, %v1538, 0.0
        %v1570 = vsel %vm1522, %v1542, 0.0
        %v1571 = vsel %vm1523, %v1546, 0.0
        %v1572 = vsel %vm1524, %v1550, 0.0
        %v1573 = vsel %vm1525, %v1554, 0.0
        %v1574 = vsel %vm1526, %v1558, 0.0
        %v1575 = vadd.f32 %v1463, %v1559
        %v1576 = vadd.f32 %v1464, %v1560
        %v1577 = vadd.f32 %v1465, %v1561
        %v1578 = vadd.f32 %v1466, %v1562
        %v1579 = vadd.f32 %v1467, %v1563
        %v1580 = vadd.f32 %v1468, %v1564
        %v1581 = vadd.f32 %v1469, %v1565
        %v1582 = vadd.f32 %v1470, %v1566
        %v1583 = vadd.f32 %v1471, %v1567
        %v1584 = vadd.f32 %v1472, %v1568
        %v1585 = vadd.f32 %v1473, %v1569
        %v1586 = vadd.f32 %v1474, %v1570
        %v1587 = vadd.f32 %v1475, %v1571
        %v1588 = vadd.f32 %v1476, %v1572
        %v1589 = vadd.f32 %v1477, %v1573
        %v1590 = vadd.f32 %v1478, %v1574
        %v1591 = vlaneseq
        %v1592 = vshrl.u32 %v1591, 7
        %v1593 = vsub.s32 2, %v1592
        %v1594 = vrot.slane %v1375, %v1593
        %v1595 = vlaneseq
        %v1596 = vshrl.u32 %v1595, 7
        %v1597 = vsub.s32 2, %v1596
        %v1598 = vrot.slane %v1376, %v1597
        %v1599 = vlaneseq
        %v1600 = vshrl.u32 %v1599, 7
        %v1601 = vsub.s32 2, %v1600
        %v1602 = vrot.slane %v1377, %v1601
        %v1603 = vlaneseq
        %v1604 = vshrl.u32 %v1603, 7
        %v1605 = vsub.s32 2, %v1604
        %v1606 = vrot.slane %v1378, %v1605
        %v1607 = vlaneseq
        %v1608 = vshrl.u32 %v1607, 7
        %v1609 = vsub.s32 2, %v1608
        %v1610 = vrot.slane %v1379, %v1609
        %v1611 = vlaneseq
        %v1612 = vshrl.u32 %v1611, 7
        %v1613 = vsub.s32 2, %v1612
        %v1614 = vrot.slane %v1380, %v1613
        %v1615 = vlaneseq
        %v1616 = vshrl.u32 %v1615, 7
        %v1617 = vsub.s32 2, %v1616
        %v1618 = vrot.slane %v1381, %v1617
        %v1619 = vlaneseq
        %v1620 = vshrl.u32 %v1619, 7
        %v1621 = vsub.s32 2, %v1620
        %v1622 = vrot.slane %v1382, %v1621
        %vm1623 = vcmp.eq.f32.partialorder %v175, %v1594
        %vm1624 = vcmp.eq.f32.partialorder %v175, %v1598
        %vm1625 = vcmp.eq.f32.partialorder %v175, %v1602
        %vm1626 = vcmp.eq.f32.partialorder %v175, %v1606
        %vm1627 = vcmp.eq.f32.partialorder %v175, %v1610
        %vm1628 = vcmp.eq.f32.partialorder %v175, %v1614
        %vm1629 = vcmp.eq.f32.partialorder %v175, %v1618
        %vm1630 = vcmp.eq.f32.partialorder %v175, %v1622
        %vm1631 = vcmp.eq.f32.partialorder %v176, %v1594
        %vm1632 = vcmp.eq.f32.partialorder %v176, %v1598
        %vm1633 = vcmp.eq.f32.partialorder %v176, %v1602
        %vm1634 = vcmp.eq.f32.partialorder %v176, %v1606
        %vm1635 = vcmp.eq.f32.partialorder %v176, %v1610
        %vm1636 = vcmp.eq.f32.partialorder %v176, %v1614
        %vm1637 = vcmp.eq.f32.partialorder %v176, %v1618
        %vm1638 = vcmp.eq.f32.partialorder %v176, %v1622
        %v1639 = vlaneseq
        %v1640 = vshrl.u32 %v1639, 7
        %v1641 = vsub.s32 6, %v1640
        %v1642 = vrot.slane %v1375, %v1641
        %v1643 = vlaneseq
        %v1644 = vshrl.u32 %v1643, 7
        %v1645 = vsub.s32 6, %v1644
        %v1646 = vrot.slane %v1376, %v1645
        %v1647 = vlaneseq
        %v1648 = vshrl.u32 %v1647, 7
        %v1649 = vsub.s32 6, %v1648
        %v1650 = vrot.slane %v1377, %v1649
        %v1651 = vlaneseq
        %v1652 = vshrl.u32 %v1651, 7
        %v1653 = vsub.s32 6, %v1652
        %v1654 = vrot.slane %v1378, %v1653
        %v1655 = vlaneseq
        %v1656 = vshrl.u32 %v1655, 7
        %v1657 = vsub.s32 6, %v1656
        %v1658 = vrot.slane %v1379, %v1657
        %v1659 = vlaneseq
        %v1660 = vshrl.u32 %v1659, 7
        %v1661 = vsub.s32 6, %v1660
        %v1662 = vrot.slane %v1380, %v1661
        %v1663 = vlaneseq
        %v1664 = vshrl.u32 %v1663, 7
        %v1665 = vsub.s32 6, %v1664
        %v1666 = vrot.slane %v1381, %v1665
        %v1667 = vlaneseq
        %v1668 = vshrl.u32 %v1667, 7
        %v1669 = vsub.s32 6, %v1668
        %v1670 = vrot.slane %v1382, %v1669
        %v1671 = vsel %vm1623, %v1642, 0.0
        %v1672 = vsel %vm1624, %v1646, 0.0
        %v1673 = vsel %vm1625, %v1650, 0.0
        %v1674 = vsel %vm1626, %v1654, 0.0
        %v1675 = vsel %vm1627, %v1658, 0.0
        %v1676 = vsel %vm1628, %v1662, 0.0
        %v1677 = vsel %vm1629, %v1666, 0.0
        %v1678 = vsel %vm1630, %v1670, 0.0
        %v1679 = vsel %vm1631, %v1642, 0.0
        %v1680 = vsel %vm1632, %v1646, 0.0
        %v1681 = vsel %vm1633, %v1650, 0.0
        %v1682 = vsel %vm1634, %v1654, 0.0
        %v1683 = vsel %vm1635, %v1658, 0.0
        %v1684 = vsel %vm1636, %v1662, 0.0
        %v1685 = vsel %vm1637, %v1666, 0.0
        %v1686 = vsel %vm1638, %v1670, 0.0
        %v1687 = vlaneseq
        %v1688 = vshrl.u32 %v1687, 7
        %v1689 = vsub.s32 3, %v1688
        %v1690 = vrot.slane %v1375, %v1689
        %v1691 = vlaneseq
        %v1692 = vshrl.u32 %v1691, 7
        %v1693 = vsub.s32 3, %v1692
        %v1694 = vrot.slane %v1376, %v1693
        %v1695 = vlaneseq
        %v1696 = vshrl.u32 %v1695, 7
        %v1697 = vsub.s32 3, %v1696
        %v1698 = vrot.slane %v1377, %v1697
        %v1699 = vlaneseq
        %v1700 = vshrl.u32 %v1699, 7
        %v1701 = vsub.s32 3, %v1700
        %v1702 = vrot.slane %v1378, %v1701
        %v1703 = vlaneseq
        %v1704 = vshrl.u32 %v1703, 7
        %v1705 = vsub.s32 3, %v1704
        %v1706 = vrot.slane %v1379, %v1705
        %v1707 = vlaneseq
        %v1708 = vshrl.u32 %v1707, 7
        %v1709 = vsub.s32 3, %v1708
        %v1710 = vrot.slane %v1380, %v1709
        %v1711 = vlaneseq
        %v1712 = vshrl.u32 %v1711, 7
        %v1713 = vsub.s32 3, %v1712
        %v1714 = vrot.slane %v1381, %v1713
        %v1715 = vlaneseq
        %v1716 = vshrl.u32 %v1715, 7
        %v1717 = vsub.s32 3, %v1716
        %v1718 = vrot.slane %v1382, %v1717
        %vm1719 = vcmp.eq.f32.partialorder %v175, %v1690
        %vm1720 = vcmp.eq.f32.partialorder %v175, %v1694
        %vm1721 = vcmp.eq.f32.partialorder %v175, %v1698
        %vm1722 = vcmp.eq.f32.partialorder %v175, %v1702
        %vm1723 = vcmp.eq.f32.partialorder %v175, %v1706
        %vm1724 = vcmp.eq.f32.partialorder %v175, %v1710
        %vm1725 = vcmp.eq.f32.partialorder %v175, %v1714
        %vm1726 = vcmp.eq.f32.partialorder %v175, %v1718
        %vm1727 = vcmp.eq.f32.partialorder %v176, %v1690
        %vm1728 = vcmp.eq.f32.partialorder %v176, %v1694
        %vm1729 = vcmp.eq.f32.partialorder %v176, %v1698
        %vm1730 = vcmp.eq.f32.partialorder %v176, %v1702
        %vm1731 = vcmp.eq.f32.partialorder %v176, %v1706
        %vm1732 = vcmp.eq.f32.partialorder %v176, %v1710
        %vm1733 = vcmp.eq.f32.partialorder %v176, %v1714
        %vm1734 = vcmp.eq.f32.partialorder %v176, %v1718
        %v1735 = vlaneseq
        %v1736 = vshrl.u32 %v1735, 7
        %v1737 = vsub.s32 7, %v1736
        %v1738 = vrot.slane %v1375, %v1737
        %v1739 = vlaneseq
        %v1740 = vshrl.u32 %v1739, 7
        %v1741 = vsub.s32 7, %v1740
        %v1742 = vrot.slane %v1376, %v1741
        %v1743 = vlaneseq
        %v1744 = vshrl.u32 %v1743, 7
        %v1745 = vsub.s32 7, %v1744
        %v1746 = vrot.slane %v1377, %v1745
        %v1747 = vlaneseq
        %v1748 = vshrl.u32 %v1747, 7
        %v1749 = vsub.s32 7, %v1748
        %v1750 = vrot.slane %v1378, %v1749
        %v1751 = vlaneseq
        %v1752 = vshrl.u32 %v1751, 7
        %v1753 = vsub.s32 7, %v1752
        %v1754 = vrot.slane %v1379, %v1753
        %v1755 = vlaneseq
        %v1756 = vshrl.u32 %v1755, 7
        %v1757 = vsub.s32 7, %v1756
        %v1758 = vrot.slane %v1380, %v1757
        %v1759 = vlaneseq
        %v1760 = vshrl.u32 %v1759, 7
        %v1761 = vsub.s32 7, %v1760
        %v1762 = vrot.slane %v1381, %v1761
        %v1763 = vlaneseq
        %v1764 = vshrl.u32 %v1763, 7
        %v1765 = vsub.s32 7, %v1764
        %v1766 = vrot.slane %v1382, %v1765
        %v1767 = vsel %vm1719, %v1738, 0.0
        %v1768 = vsel %vm1720, %v1742, 0.0
        %v1769 = vsel %vm1721, %v1746, 0.0
        %v1770 = vsel %vm1722, %v1750, 0.0
        %v1771 = vsel %vm1723, %v1754, 0.0
        %v1772 = vsel %vm1724, %v1758, 0.0
        %v1773 = vsel %vm1725, %v1762, 0.0
        %v1774 = vsel %vm1726, %v1766, 0.0
        %v1775 = vsel %vm1727, %v1738, 0.0
        %v1776 = vsel %vm1728, %v1742, 0.0
        %v1777 = vsel %vm1729, %v1746, 0.0
        %v1778 = vsel %vm1730, %v1750, 0.0
        %v1779 = vsel %vm1731, %v1754, 0.0
        %v1780 = vsel %vm1732, %v1758, 0.0
        %v1781 = vsel %vm1733, %v1762, 0.0
        %v1782 = vsel %vm1734, %v1766, 0.0
        %v1783 = vadd.f32 %v1671, %v1767
        %v1784 = vadd.f32 %v1672, %v1768
        %v1785 = vadd.f32 %v1673, %v1769
        %v1786 = vadd.f32 %v1674, %v1770
        %v1787 = vadd.f32 %v1675, %v1771
        %v1788 = vadd.f32 %v1676, %v1772
        %v1789 = vadd.f32 %v1677, %v1773
        %v1790 = vadd.f32 %v1678, %v1774
        %v1791 = vadd.f32 %v1679, %v1775
        %v1792 = vadd.f32 %v1680, %v1776
        %v1793 = vadd.f32 %v1681, %v1777
        %v1794 = vadd.f32 %v1682, %v1778
        %v1795 = vadd.f32 %v1683, %v1779
        %v1796 = vadd.f32 %v1684, %v1780
        %v1797 = vadd.f32 %v1685, %v1781
        %v1798 = vadd.f32 %v1686, %v1782
        %s1799 = scalar_lea.vmem %s170, 64
        %v1800 = vld [vmem:[%s1799] sm:$0xff]
        %v1801 = vld [vmem:[%s1799 + $0x8] sm:$0xff]
        %v1802 = vld [vmem:[%s1799 + $0x10] sm:$0xff]
        %v1803 = vld [vmem:[%s1799 + $0x18] sm:$0xff]
        %v1804 = vld [vmem:[%s1799 + $0x20] sm:$0xff]
        %v1805 = vld [vmem:[%s1799 + $0x28] sm:$0xff]
        %v1806 = vld [vmem:[%s1799 + $0x30] sm:$0xff]
        %v1807 = vld [vmem:[%s1799 + $0x38] sm:$0xff]
        %v1809 = vsel %vm609, %v1800, 0
        %v1812 = vsel %vm609, %v1801, 0
        %v1815 = vsel %vm609, %v1802, 0
        %v1818 = vsel %vm609, %v1803, 0
        %v1821 = vsel %vm609, %v1804, 0
        %v1824 = vsel %vm609, %v1805, 0
        %v1827 = vsel %vm609, %v1806, 0
        %v1830 = vsel %vm609, %v1807, 0
        %1832 = vmatprep.subr.mxu0 %v1576
        %1833 = vmatpush1.msra.mxu0 %v1575
        %1834 = vmatprep.subr.mxu0 %v1584
        %1835 = vmatpush1.msra.mxu0 %v1583
        %1836 = vmatprep.subr.mxu0 0.0
        %1837 = vmatpush1.msra.mxu0 0.0
        %1838 = vmatprep.subr.mxu0 0.0
        %1839 = vmatpush1.msra.mxu0 0.0
        %1840 = vmatprep.subr.mxu0 0.0
        %1841 = vmatpush1.msra.mxu0 0.0
        %1842 = vmatprep.subr.mxu0 0.0
        %1843 = vmatpush1.msra.mxu0 0.0
        %1844 = vmatprep.subr.mxu0 0.0
        %1845 = vmatpush1.msra.mxu0 0.0
        %1846 = vmatprep.subr.mxu0 0.0
        %1847 = vmatpush1.msra.mxu0 0.0
        %1848 = vmatprep.subr.mxu0 0.0
        %1849 = vmatpush1.msra.mxu0 0.0
        %1850 = vmatprep.subr.mxu0 0.0
        %1851 = vmatpush1.msra.mxu0 0.0
        %1852 = vmatprep.subr.mxu0 0.0
        %1853 = vmatpush1.msra.mxu0 0.0
        %1854 = vmatprep.subr.mxu0 0.0
        %1855 = vmatpush1.msra.mxu0 0.0
        %1856 = vmatprep.subr.mxu0 0.0
        %1857 = vmatpush1.msra.mxu0 0.0
        %1858 = vmatprep.subr.mxu0 0.0
        %1859 = vmatpush1.msra.mxu0 0.0
        %1860 = vmatprep.subr.mxu0 0.0
        %1861 = vmatpush1.msra.mxu0 0.0
        %1862 = vmatprep.subr.mxu0 0.0
        %1863 = vmatpush1.msra.mxu0 0.0
        %1864 = vmatprep.subr.mxu0 0.0
        %1865 = vmatpush1.msra.mxu0 0.0
        %1866 = vmatprep.subr.mxu0 0.0
        %1867 = vmatpush1.msra.mxu0 0.0
        %1868 = vmatprep.subr.mxu0 0.0
        %1869 = vmatpush1.msra.mxu0 0.0
        %1870 = vmatprep.subr.mxu0 0.0
        %1871 = vmatpush1.msra.mxu0 0.0
        %1872 = vmatprep.subr.mxu0 0.0
        %1873 = vmatpush1.msra.mxu0 0.0
        %1874 = vmatprep.subr.mxu0 0.0
        %1875 = vmatpush1.msra.mxu0 0.0
        %1876 = vmatprep.subr.mxu0 0.0
        %1877 = vmatpush1.msra.mxu0 0.0
        %1878 = vmatprep.subr.mxu0 0.0
        %1879 = vmatpush1.msra.mxu0 0.0
        %1880 = vmatprep.subr.mxu0 0.0
        %1881 = vmatpush1.msra.mxu0 0.0
        %1882 = vmatprep.subr.mxu0 0.0
        %1883 = vmatpush1.msra.mxu0 0.0
        %1884 = vmatprep.subr.mxu0 0.0
        %1885 = vmatpush1.msra.mxu0 0.0
        %1886 = vmatprep.subr.mxu0 0.0
        %1887 = vmatpush1.msra.mxu0 0.0
        %1888 = vmatprep.subr.mxu0 0.0
        %1889 = vmatpush1.msra.mxu0 0.0
        %1890 = vmatprep.subr.mxu0 0.0
        %1891 = vmatpush1.msra.mxu0 0.0
        %1892 = vmatprep.subr.mxu0 0.0
        %1893 = vmatpush1.msra.mxu0 0.0
        %1894 = vmatprep.subr.mxu0 0.0
        %1895 = vmatpush1.msra.mxu0 0.0
        %1896 = vmatprep.mubr.f32.mxu0 0.0
        %1897 = vmatmul.mubr.f32.gmra.mrb[0].mxu0 %v1809
        %v1898 = vpop.f32.mrb[0].mxu0
        %v1899 = vadd.f32 0.0, %v1898
        %v1900 = vpop.f32.mrb[0].mxu0
        %v1901 = vadd.f32 0.0, %v1900
        %1902 = vmatprep.mubr.f32.mxu0 0.0
        %1903 = vmatmul.mubr.f32.gmra.mrb[0].mxu0 %v1812
        %v1904 = vpop.f32.mrb[0].mxu0
        %v1905 = vadd.f32 0.0, %v1904
        %v1906 = vpop.f32.mrb[0].mxu0
        %v1907 = vadd.f32 0.0, %v1906
        %1908 = vmatprep.mubr.f32.mxu0 0.0
        %1909 = vmatmul.mubr.f32.gmra.mrb[0].mxu0 %v1815
        %v1910 = vpop.f32.mrb[0].mxu0
        %v1911 = vadd.f32 0.0, %v1910
        %v1912 = vpop.f32.mrb[0].mxu0
        %v1913 = vadd.f32 0.0, %v1912
        %1914 = vmatprep.mubr.f32.mxu0 0.0
        %1915 = vmatmul.mubr.f32.gmra.mrb[0].mxu0 %v1818
        %v1916 = vpop.f32.mrb[0].mxu0
        %v1917 = vadd.f32 0.0, %v1916
        %v1918 = vpop.f32.mrb[0].mxu0
        %v1919 = vadd.f32 0.0, %v1918
        %1920 = vmatprep.mubr.f32.mxu0 0.0
        %1921 = vmatmul.mubr.f32.gmra.mrb[0].mxu0 %v1821
        %v1922 = vpop.f32.mrb[0].mxu0
        %v1923 = vadd.f32 0.0, %v1922
        %v1924 = vpop.f32.mrb[0].mxu0
        %v1925 = vadd.f32 0.0, %v1924
        %1926 = vmatprep.mubr.f32.mxu0 0.0
        %1927 = vmatmul.mubr.f32.gmra.mrb[0].mxu0 %v1824
        %v1928 = vpop.f32.mrb[0].mxu0
        %v1929 = vadd.f32 0.0, %v1928
        %v1930 = vpop.f32.mrb[0].mxu0
        %v1931 = vadd.f32 0.0, %v1930
        %1932 = vmatprep.mubr.f32.mxu0 0.0
        %1933 = vmatmul.mubr.f32.gmra.mrb[0].mxu0 %v1827
        %v1934 = vpop.f32.mrb[0].mxu0
        %v1935 = vadd.f32 0.0, %v1934
        %v1936 = vpop.f32.mrb[0].mxu0
        %v1937 = vadd.f32 0.0, %v1936
        %1938 = vmatprep.mubr.f32.mxu0 0.0
        %1939 = vmatmul.mubr.f32.gmra.mrb[0].mxu0 %v1830
        %v1940 = vpop.f32.mrb[0].mxu0
        %v1941 = vadd.f32 0.0, %v1940
        %v1942 = vpop.f32.mrb[0].mxu0
        %v1943 = vadd.f32 0.0, %v1942
        %1944 = vdwg.mxu0
        %1945 = vmatprep.subr.mxu0 %v1578
        %1946 = vmatpush1.msra.mxu0 %v1577
        %1947 = vmatprep.subr.mxu0 %v1586
        %1948 = vmatpush1.msra.mxu0 %v1585
        %1949 = vmatprep.subr.mxu0 0.0
        %1950 = vmatpush1.msra.mxu0 0.0
        %1951 = vmatprep.subr.mxu0 0.0
        %1952 = vmatpush1.msra.mxu0 0.0
        %1953 = vmatprep.subr.mxu0 0.0
        %1954 = vmatpush1.msra.mxu0 0.0
        %1955 = vmatprep.subr.mxu0 0.0
        %1956 = vmatpush1.msra.mxu0 0.0
        %1957 = vmatprep.subr.mxu0 0.0
        %1958 = vmatpush1.msra.mxu0 0.0
        %1959 = vmatprep.subr.mxu0 0.0
        %1960 = vmatpush1.msra.mxu0 0.0
        %1961 = vmatprep.subr.mxu0 0.0
        %1962 = vmatpush1.msra.mxu0 0.0
        %1963 = vmatprep.subr.mxu0 0.0
        %1964 = vmatpush1.msra.mxu0 0.0
        %1965 = vmatprep.subr.mxu0 0.0
        %1966 = vmatpush1.msra.mxu0 0.0
        %1967 = vmatprep.subr.mxu0 0.0
        %1968 = vmatpush1.msra.mxu0 0.0
        %1969 = vmatprep.subr.mxu0 0.0
        %1970 = vmatpush1.msra.mxu0 0.0
        %1971 = vmatprep.subr.mxu0 0.0
        %1972 = vmatpush1.msra.mxu0 0.0
        %1973 = vmatprep.subr.mxu0 0.0
        %1974 = vmatpush1.msra.mxu0 0.0
        %1975 = vmatprep.subr.mxu0 0.0
        %1976 = vmatpush1.msra.mxu0 0.0
        %1977 = vmatprep.subr.mxu0 0.0
        %1978 = vmatpush1.msra.mxu0 0.0
        %1979 = vmatprep.subr.mxu0 0.0
        %1980 = vmatpush1.msra.mxu0 0.0
        %1981 = vmatprep.subr.mxu0 0.0
        %1982 = vmatpush1.msra.mxu0 0.0
        %1983 = vmatprep.subr.mxu0 0.0
        %1984 = vmatpush1.msra.mxu0 0.0
        %1985 = vmatprep.subr.mxu0 0.0
        %1986 = vmatpush1.msra.mxu0 0.0
        %1987 = vmatprep.subr.mxu0 0.0
        %1988 = vmatpush1.msra.mxu0 0.0
        %1989 = vmatprep.subr.mxu0 0.0
        %1990 = vmatpush1.msra.mxu0 0.0
        %1991 = vmatprep.subr.mxu0 0.0
        %1992 = vmatpush1.msra.mxu0 0.0
        %1993 = vmatprep.subr.mxu0 0.0
        %1994 = vmatpush1.msra.mxu0 0.0
        %1995 = vmatprep.subr.mxu0 0.0
        %1996 = vmatpush1.msra.mxu0 0.0
        %1997 = vmatprep.subr.mxu0 0.0
        %1998 = vmatpush1.msra.mxu0 0.0
        %1999 = vmatprep.subr.mxu0 0.0
        %2000 = vmatpush1.msra.mxu0 0.0
        %2001 = vmatprep.subr.mxu0 0.0
        %2002 = vmatpush1.msra.mxu0 0.0
        %2003 = vmatprep.subr.mxu0 0.0
        %2004 = vmatpush1.msra.mxu0 0.0
        %2005 = vmatprep.subr.mxu0 0.0
        %2006 = vmatpush1.msra.mxu0 0.0
        %2007 = vmatprep.subr.mxu0 0.0
        %2008 = vmatpush1.msra.mxu0 0.0
        %2009 = vmatprep.mubr.f32.mxu0 0.0
        %2010 = vmatmul.mubr.f32.gmra.mrb[0].mxu0 %v1809
        %v2011 = vpop.f32.mrb[0].mxu0
        %v2012 = vadd.f32 0.0, %v2011
        %v2013 = vpop.f32.mrb[0].mxu0
        %v2014 = vadd.f32 0.0, %v2013
        %2015 = vmatprep.mubr.f32.mxu0 0.0
        %2016 = vmatmul.mubr.f32.gmra.mrb[0].mxu0 %v1812
        %v2017 = vpop.f32.mrb[0].mxu0
        %v2018 = vadd.f32 0.0, %v2017
        %v2019 = vpop.f32.mrb[0].mxu0
        %v2020 = vadd.f32 0.0, %v2019
        %2021 = vmatprep.mubr.f32.mxu0 0.0
        %2022 = vmatmul.mubr.f32.gmra.mrb[0].mxu0 %v1815
        %v2023 = vpop.f32.mrb[0].mxu0
        %v2024 = vadd.f32 0.0, %v2023
        %v2025 = vpop.f32.mrb[0].mxu0
        %v2026 = vadd.f32 0.0, %v2025
        %2027 = vmatprep.mubr.f32.mxu0 0.0
        %2028 = vmatmul.mubr.f32.gmra.mrb[0].mxu0 %v1818
        %v2029 = vpop.f32.mrb[0].mxu0
        %v2030 = vadd.f32 0.0, %v2029
        %v2031 = vpop.f32.mrb[0].mxu0
        %v2032 = vadd.f32 0.0, %v2031
        %2033 = vmatprep.mubr.f32.mxu0 0.0
        %2034 = vmatmul.mubr.f32.gmra.mrb[0].mxu0 %v1821
        %v2035 = vpop.f32.mrb[0].mxu0
        %v2036 = vadd.f32 0.0, %v2035
        %v2037 = vpop.f32.mrb[0].mxu0
        %v2038 = vadd.f32 0.0, %v2037
        %2039 = vmatprep.mubr.f32.mxu0 0.0
        %2040 = vmatmul.mubr.f32.gmra.mrb[0].mxu0 %v1824
        %v2041 = vpop.f32.mrb[0].mxu0
        %v2042 = vadd.f32 0.0, %v2041
        %v2043 = vpop.f32.mrb[0].mxu0
        %v2044 = vadd.f32 0.0, %v2043
        %2045 = vmatprep.mubr.f32.mxu0 0.0
        %2046 = vmatmul.mubr.f32.gmra.mrb[0].mxu0 %v1827
        %v2047 = vpop.f32.mrb[0].mxu0
        %v2048 = vadd.f32 0.0, %v2047
        %v2049 = vpop.f32.mrb[0].mxu0
        %v2050 = vadd.f32 0.0, %v2049
        %2051 = vmatprep.mubr.f32.mxu0 0.0
        %2052 = vmatmul.mubr.f32.gmra.mrb[0].mxu0 %v1830
        %v2053 = vpop.f32.mrb[0].mxu0
        %v2054 = vadd.f32 0.0, %v2053
        %v2055 = vpop.f32.mrb[0].mxu0
        %v2056 = vadd.f32 0.0, %v2055
        %2057 = vdwg.mxu0
        %2058 = vmatprep.subr.mxu0 %v1580
        %2059 = vmatpush1.msra.mxu0 %v1579
        %2060 = vmatprep.subr.mxu0 %v1588
        %2061 = vmatpush1.msra.mxu0 %v1587
        %2062 = vmatprep.subr.mxu0 0.0
        %2063 = vmatpush1.msra.mxu0 0.0
        %2064 = vmatprep.subr.mxu0 0.0
        %2065 = vmatpush1.msra.mxu0 0.0
        %2066 = vmatprep.subr.mxu0 0.0
        %2067 = vmatpush1.msra.mxu0 0.0
        %2068 = vmatprep.subr.mxu0 0.0
        %2069 = vmatpush1.msra.mxu0 0.0
        %2070 = vmatprep.subr.mxu0 0.0
        %2071 = vmatpush1.msra.mxu0 0.0
        %2072 = vmatprep.subr.mxu0 0.0
        %2073 = vmatpush1.msra.mxu0 0.0
        %2074 = vmatprep.subr.mxu0 0.0
        %2075 = vmatpush1.msra.mxu0 0.0
        %2076 = vmatprep.subr.mxu0 0.0
        %2077 = vmatpush1.msra.mxu0 0.0
        %2078 = vmatprep.subr.mxu0 0.0
        %2079 = vmatpush1.msra.mxu0 0.0
        %2080 = vmatprep.subr.mxu0 0.0
        %2081 = vmatpush1.msra.mxu0 0.0
        %2082 = vmatprep.subr.mxu0 0.0
        %2083 = vmatpush1.msra.mxu0 0.0
        %2084 = vmatprep.subr.mxu0 0.0
        %2085 = vmatpush1.msra.mxu0 0.0
        %2086 = vmatprep.subr.mxu0 0.0
        %2087 = vmatpush1.msra.mxu0 0.0
        %2088 = vmatprep.subr.mxu0 0.0
        %2089 = vmatpush1.msra.mxu0 0.0
        %2090 = vmatprep.subr.mxu0 0.0
        %2091 = vmatpush1.msra.mxu0 0.0
        %2092 = vmatprep.subr.mxu0 0.0
        %2093 = vmatpush1.msra.mxu0 0.0
        %2094 = vmatprep.subr.mxu0 0.0
        %2095 = vmatpush1.msra.mxu0 0.0
        %2096 = vmatprep.subr.mxu0 0.0
        %2097 = vmatpush1.msra.mxu0 0.0
        %2098 = vmatprep.subr.mxu0 0.0
        %2099 = vmatpush1.msra.mxu0 0.0
        %2100 = vmatprep.subr.mxu0 0.0
        %2101 = vmatpush1.msra.mxu0 0.0
        %2102 = vmatprep.subr.mxu0 0.0
        %2103 = vmatpush1.msra.mxu0 0.0
        %2104 = vmatprep.subr.mxu0 0.0
        %2105 = vmatpush1.msra.mxu0 0.0
        %2106 = vmatprep.subr.mxu0 0.0
        %2107 = vmatpush1.msra.mxu0 0.0
        %2108 = vmatprep.subr.mxu0 0.0
        %2109 = vmatpush1.msra.mxu0 0.0
        %2110 = vmatprep.subr.mxu0 0.0
        %2111 = vmatpush1.msra.mxu0 0.0
        %2112 = vmatprep.subr.mxu0 0.0
        %2113 = vmatpush1.msra.mxu0 0.0
        %2114 = vmatprep.subr.mxu0 0.0
        %2115 = vmatpush1.msra.mxu0 0.0
        %2116 = vmatprep.subr.mxu0 0.0
        %2117 = vmatpush1.msra.mxu0 0.0
        %2118 = vmatprep.subr.mxu0 0.0
        %2119 = vmatpush1.msra.mxu0 0.0
        %2120 = vmatprep.subr.mxu0 0.0
        %2121 = vmatpush1.msra.mxu0 0.0
        %2122 = vmatprep.mubr.f32.mxu0 0.0
        %2123 = vmatmul.mubr.f32.gmra.mrb[0].mxu0 %v1809
        %v2124 = vpop.f32.mrb[0].mxu0
        %v2125 = vadd.f32 0.0, %v2124
        %v2126 = vpop.f32.mrb[0].mxu0
        %v2127 = vadd.f32 0.0, %v2126
        %2128 = vmatprep.mubr.f32.mxu0 0.0
        %2129 = vmatmul.mubr.f32.gmra.mrb[0].mxu0 %v1812
        %v2130 = vpop.f32.mrb[0].mxu0
        %v2131 = vadd.f32 0.0, %v2130
        %v2132 = vpop.f32.mrb[0].mxu0
        %v2133 = vadd.f32 0.0, %v2132
        %2134 = vmatprep.mubr.f32.mxu0 0.0
        %2135 = vmatmul.mubr.f32.gmra.mrb[0].mxu0 %v1815
        %v2136 = vpop.f32.mrb[0].mxu0
        %v2137 = vadd.f32 0.0, %v2136
        %v2138 = vpop.f32.mrb[0].mxu0
        %v2139 = vadd.f32 0.0, %v2138
        %2140 = vmatprep.mubr.f32.mxu0 0.0
        %2141 = vmatmul.mubr.f32.gmra.mrb[0].mxu0 %v1818
        %v2142 = vpop.f32.mrb[0].mxu0
        %v2143 = vadd.f32 0.0, %v2142
        %v2144 = vpop.f32.mrb[0].mxu0
        %v2145 = vadd.f32 0.0, %v2144
        %2146 = vmatprep.mubr.f32.mxu0 0.0
        %2147 = vmatmul.mubr.f32.gmra.mrb[0].mxu0 %v1821
        %v2148 = vpop.f32.mrb[0].mxu0
        %v2149 = vadd.f32 0.0, %v2148
        %v2150 = vpop.f32.mrb[0].mxu0
        %v2151 = vadd.f32 0.0, %v2150
        %2152 = vmatprep.mubr.f32.mxu0 0.0
        %2153 = vmatmul.mubr.f32.gmra.mrb[0].mxu0 %v1824
        %v2154 = vpop.f32.mrb[0].mxu0
        %v2155 = vadd.f32 0.0, %v2154
        %v2156 = vpop.f32.mrb[0].mxu0
        %v2157 = vadd.f32 0.0, %v2156
        %2158 = vmatprep.mubr.f32.mxu0 0.0
        %2159 = vmatmul.mubr.f32.gmra.mrb[0].mxu0 %v1827
        %v2160 = vpop.f32.mrb[0].mxu0
        %v2161 = vadd.f32 0.0, %v2160
        %v2162 = vpop.f32.mrb[0].mxu0
        %v2163 = vadd.f32 0.0, %v2162
        %2164 = vmatprep.mubr.f32.mxu0 0.0
        %2165 = vmatmul.mubr.f32.gmra.mrb[0].mxu0 %v1830
        %v2166 = vpop.f32.mrb[0].mxu0
        %v2167 = vadd.f32 0.0, %v2166
        %v2168 = vpop.f32.mrb[0].mxu0
        %v2169 = vadd.f32 0.0, %v2168
        %2170 = vdwg.mxu0
        %2171 = vmatprep.subr.mxu0 %v1582
        %2172 = vmatpush1.msra.mxu0 %v1581
        %2173 = vmatprep.subr.mxu0 %v1590
        %2174 = vmatpush1.msra.mxu0 %v1589
        %2175 = vmatprep.subr.mxu0 0.0
        %2176 = vmatpush1.msra.mxu0 0.0
        %2177 = vmatprep.subr.mxu0 0.0
        %2178 = vmatpush1.msra.mxu0 0.0
        %2179 = vmatprep.subr.mxu0 0.0
        %2180 = vmatpush1.msra.mxu0 0.0
        %2181 = vmatprep.subr.mxu0 0.0
        %2182 = vmatpush1.msra.mxu0 0.0
        %2183 = vmatprep.subr.mxu0 0.0
        %2184 = vmatpush1.msra.mxu0 0.0
        %2185 = vmatprep.subr.mxu0 0.0
        %2186 = vmatpush1.msra.mxu0 0.0
        %2187 = vmatprep.subr.mxu0 0.0
        %2188 = vmatpush1.msra.mxu0 0.0
        %2189 = vmatprep.subr.mxu0 0.0
        %2190 = vmatpush1.msra.mxu0 0.0
        %2191 = vmatprep.subr.mxu0 0.0
        %2192 = vmatpush1.msra.mxu0 0.0
        %2193 = vmatprep.subr.mxu0 0.0
        %2194 = vmatpush1.msra.mxu0 0.0
        %2195 = vmatprep.subr.mxu0 0.0
        %2196 = vmatpush1.msra.mxu0 0.0
        %2197 = vmatprep.subr.mxu0 0.0
        %2198 = vmatpush1.msra.mxu0 0.0
        %2199 = vmatprep.subr.mxu0 0.0
        %2200 = vmatpush1.msra.mxu0 0.0
        %2201 = vmatprep.subr.mxu0 0.0
        %2202 = vmatpush1.msra.mxu0 0.0
        %2203 = vmatprep.subr.mxu0 0.0
        %2204 = vmatpush1.msra.mxu0 0.0
        %2205 = vmatprep.subr.mxu0 0.0
        %2206 = vmatpush1.msra.mxu0 0.0
        %2207 = vmatprep.subr.mxu0 0.0
        %2208 = vmatpush1.msra.mxu0 0.0
        %2209 = vmatprep.subr.mxu0 0.0
        %2210 = vmatpush1.msra.mxu0 0.0
        %2211 = vmatprep.subr.mxu0 0.0
        %2212 = vmatpush1.msra.mxu0 0.0
        %2213 = vmatprep.subr.mxu0 0.0
        %2214 = vmatpush1.msra.mxu0 0.0
        %2215 = vmatprep.subr.mxu0 0.0
        %2216 = vmatpush1.msra.mxu0 0.0
        %2217 = vmatprep.subr.mxu0 0.0
        %2218 = vmatpush1.msra.mxu0 0.0
        %2219 = vmatprep.subr.mxu0 0.0
        %2220 = vmatpush1.msra.mxu0 0.0
        %2221 = vmatprep.subr.mxu0 0.0
        %2222 = vmatpush1.msra.mxu0 0.0
        %2223 = vmatprep.subr.mxu0 0.0
        %2224 = vmatpush1.msra.mxu0 0.0
        %2225 = vmatprep.subr.mxu0 0.0
        %2226 = vmatpush1.msra.mxu0 0.0
        %2227 = vmatprep.subr.mxu0 0.0
        %2228 = vmatpush1.msra.mxu0 0.0
        %2229 = vmatprep.subr.mxu0 0.0
        %2230 = vmatpush1.msra.mxu0 0.0
        %2231 = vmatprep.subr.mxu0 0.0
        %2232 = vmatpush1.msra.mxu0 0.0
        %2233 = vmatprep.subr.mxu0 0.0
        %2234 = vmatpush1.msra.mxu0 0.0
        %2235 = vmatprep.mubr.f32.mxu0 0.0
        %2236 = vmatmul.mubr.f32.gmra.mrb[0].mxu0 %v1809
        %v2237 = vpop.f32.mrb[0].mxu0
        %v2238 = vadd.f32 0.0, %v2237
        %v2239 = vpop.f32.mrb[0].mxu0
        %v2240 = vadd.f32 0.0, %v2239
        %2241 = vmatprep.mubr.f32.mxu0 0.0
        %2242 = vmatmul.mubr.f32.gmra.mrb[0].mxu0 %v1812
        %v2243 = vpop.f32.mrb[0].mxu0
        %v2244 = vadd.f32 0.0, %v2243
        %v2245 = vpop.f32.mrb[0].mxu0
        %v2246 = vadd.f32 0.0, %v2245
        %2247 = vmatprep.mubr.f32.mxu0 0.0
        %2248 = vmatmul.mubr.f32.gmra.mrb[0].mxu0 %v1815
        %v2249 = vpop.f32.mrb[0].mxu0
        %v2250 = vadd.f32 0.0, %v2249
        %v2251 = vpop.f32.mrb[0].mxu0
        %v2252 = vadd.f32 0.0, %v2251
        %2253 = vmatprep.mubr.f32.mxu0 0.0
        %2254 = vmatmul.mubr.f32.gmra.mrb[0].mxu0 %v1818
        %v2255 = vpop.f32.mrb[0].mxu0
        %v2256 = vadd.f32 0.0, %v2255
        %v2257 = vpop.f32.mrb[0].mxu0
        %v2258 = vadd.f32 0.0, %v2257
        %2259 = vmatprep.mubr.f32.mxu0 0.0
        %2260 = vmatmul.mubr.f32.gmra.mrb[0].mxu0 %v1821
        %v2261 = vpop.f32.mrb[0].mxu0
        %v2262 = vadd.f32 0.0, %v2261
        %v2263 = vpop.f32.mrb[0].mxu0
        %v2264 = vadd.f32 0.0, %v2263
        %2265 = vmatprep.mubr.f32.mxu0 0.0
        %2266 = vmatmul.mubr.f32.gmra.mrb[0].mxu0 %v1824
        %v2267 = vpop.f32.mrb[0].mxu0
        %v2268 = vadd.f32 0.0, %v2267
        %v2269 = vpop.f32.mrb[0].mxu0
        %v2270 = vadd.f32 0.0, %v2269
        %2271 = vmatprep.mubr.f32.mxu0 0.0
        %2272 = vmatmul.mubr.f32.gmra.mrb[0].mxu0 %v1827
        %v2273 = vpop.f32.mrb[0].mxu0
        %v2274 = vadd.f32 0.0, %v2273
        %v2275 = vpop.f32.mrb[0].mxu0
        %v2276 = vadd.f32 0.0, %v2275
        %2277 = vmatprep.mubr.f32.mxu0 0.0
        %2278 = vmatmul.mubr.f32.gmra.mrb[0].mxu0 %v1830
        %v2279 = vpop.f32.mrb[0].mxu0
        %v2280 = vadd.f32 0.0, %v2279
        %v2281 = vpop.f32.mrb[0].mxu0
        %v2282 = vadd.f32 0.0, %v2281
        %2283 = vdwg.mxu0
        %v2284 = vmul.f32 %v1899, %v1783
        %v2285 = vmul.f32 %v1901, %v1784
        %v2286 = vmul.f32 %v2012, %v1785
        %v2287 = vmul.f32 %v2014, %v1786
        %v2288 = vmul.f32 %v2125, %v1787
        %v2289 = vmul.f32 %v2127, %v1788
        %v2290 = vmul.f32 %v2238, %v1789
        %v2291 = vmul.f32 %v2240, %v1790
        %v2292 = vmul.f32 %v1905, %v1791
        %v2293 = vmul.f32 %v1907, %v1792
        %v2294 = vmul.f32 %v2018, %v1793
        %v2295 = vmul.f32 %v2020, %v1794
        %v2296 = vmul.f32 %v2131, %v1795
        %v2297 = vmul.f32 %v2133, %v1796
        %v2298 = vmul.f32 %v2244, %v1797
        %v2299 = vmul.f32 %v2246, %v1798
        %v2300 = vadd.f32 %v2284, %v2292
        %v2301 = vrot.slane %v2300, 4
        %v2302 = vadd.f32 %v2300, %v2301
        %v2303 = vrot.slane %v2302, 2
        %v2304 = vadd.f32 %v2302, %v2303
        %v2305 = vrot.slane %v2304, 1
        %v2306 = vadd.f32 %v2304, %v2305
        %v2307 = vadd.f32 %v2285, %v2293
        %v2308 = vrot.slane %v2307, 4
        %v2309 = vadd.f32 %v2307, %v2308
        %v2310 = vrot.slane %v2309, 2
        %v2311 = vadd.f32 %v2309, %v2310
        %v2312 = vrot.slane %v2311, 1
        %v2313 = vadd.f32 %v2311, %v2312
        %v2314 = vadd.f32 %v2286, %v2294
        %v2315 = vrot.slane %v2314, 4
        %v2316 = vadd.f32 %v2314, %v2315
        %v2317 = vrot.slane %v2316, 2
        %v2318 = vadd.f32 %v2316, %v2317
        %v2319 = vrot.slane %v2318, 1
        %v2320 = vadd.f32 %v2318, %v2319
        %v2321 = vadd.f32 %v2287, %v2295
        %v2322 = vrot.slane %v2321, 4
        %v2323 = vadd.f32 %v2321, %v2322
        %v2324 = vrot.slane %v2323, 2
        %v2325 = vadd.f32 %v2323, %v2324
        %v2326 = vrot.slane %v2325, 1
        %v2327 = vadd.f32 %v2325, %v2326
        %v2328 = vadd.f32 %v2288, %v2296
        %v2329 = vrot.slane %v2328, 4
        %v2330 = vadd.f32 %v2328, %v2329
        %v2331 = vrot.slane %v2330, 2
        %v2332 = vadd.f32 %v2330, %v2331
        %v2333 = vrot.slane %v2332, 1
        %v2334 = vadd.f32 %v2332, %v2333
        %v2335 = vadd.f32 %v2289, %v2297
        %v2336 = vrot.slane %v2335, 4
        %v2337 = vadd.f32 %v2335, %v2336
        %v2338 = vrot.slane %v2337, 2
        %v2339 = vadd.f32 %v2337, %v2338
        %v2340 = vrot.slane %v2339, 1
        %v2341 = vadd.f32 %v2339, %v2340
        %v2342 = vadd.f32 %v2290, %v2298
        %v2343 = vrot.slane %v2342, 4
        %v2344 = vadd.f32 %v2342, %v2343
        %v2345 = vrot.slane %v2344, 2
        %v2346 = vadd.f32 %v2344, %v2345
        %v2347 = vrot.slane %v2346, 1
        %v2348 = vadd.f32 %v2346, %v2347
        %v2349 = vadd.f32 %v2291, %v2299
        %v2350 = vrot.slane %v2349, 4
        %v2351 = vadd.f32 %v2349, %v2350
        %v2352 = vrot.slane %v2351, 2
        %v2353 = vadd.f32 %v2351, %v2352
        %v2354 = vrot.slane %v2353, 1
        %v2355 = vadd.f32 %v2353, %v2354
        %v2356 = vmul.f32 %v1911, %v1783
        %v2357 = vmul.f32 %v1913, %v1784
        %v2358 = vmul.f32 %v2024, %v1785
        %v2359 = vmul.f32 %v2026, %v1786
        %v2360 = vmul.f32 %v2137, %v1787
        %v2361 = vmul.f32 %v2139, %v1788
        %v2362 = vmul.f32 %v2250, %v1789
        %v2363 = vmul.f32 %v2252, %v1790
        %v2364 = vmul.f32 %v1917, %v1791
        %v2365 = vmul.f32 %v1919, %v1792
        %v2366 = vmul.f32 %v2030, %v1793
        %v2367 = vmul.f32 %v2032, %v1794
        %v2368 = vmul.f32 %v2143, %v1795
        %v2369 = vmul.f32 %v2145, %v1796
        %v2370 = vmul.f32 %v2256, %v1797
        %v2371 = vmul.f32 %v2258, %v1798
        %v2372 = vadd.f32 %v2356, %v2364
        %v2373 = vrot.slane %v2372, 4
        %v2374 = vadd.f32 %v2372, %v2373
        %v2375 = vrot.slane %v2374, 2
        %v2376 = vadd.f32 %v2374, %v2375
        %v2377 = vrot.slane %v2376, 1
        %v2378 = vadd.f32 %v2376, %v2377
        %v2379 = vadd.f32 %v2357, %v2365
        %v2380 = vrot.slane %v2379, 4
        %v2381 = vadd.f32 %v2379, %v2380
        %v2382 = vrot.slane %v2381, 2
        %v2383 = vadd.f32 %v2381, %v2382
        %v2384 = vrot.slane %v2383, 1
        %v2385 = vadd.f32 %v2383, %v2384
        %v2386 = vadd.f32 %v2358, %v2366
        %v2387 = vrot.slane %v2386, 4
        %v2388 = vadd.f32 %v2386, %v2387
        %v2389 = vrot.slane %v2388, 2
        %v2390 = vadd.f32 %v2388, %v2389
        %v2391 = vrot.slane %v2390, 1
        %v2392 = vadd.f32 %v2390, %v2391
        %v2393 = vadd.f32 %v2359, %v2367
        %v2394 = vrot.slane %v2393, 4
        %v2395 = vadd.f32 %v2393, %v2394
        %v2396 = vrot.slane %v2395, 2
        %v2397 = vadd.f32 %v2395, %v2396
        %v2398 = vrot.slane %v2397, 1
        %v2399 = vadd.f32 %v2397, %v2398
        %v2400 = vadd.f32 %v2360, %v2368
        %v2401 = vrot.slane %v2400, 4
        %v2402 = vadd.f32 %v2400, %v2401
        %v2403 = vrot.slane %v2402, 2
        %v2404 = vadd.f32 %v2402, %v2403
        %v2405 = vrot.slane %v2404, 1
        %v2406 = vadd.f32 %v2404, %v2405
        %v2407 = vadd.f32 %v2361, %v2369
        %v2408 = vrot.slane %v2407, 4
        %v2409 = vadd.f32 %v2407, %v2408
        %v2410 = vrot.slane %v2409, 2
        %v2411 = vadd.f32 %v2409, %v2410
        %v2412 = vrot.slane %v2411, 1
        %v2413 = vadd.f32 %v2411, %v2412
        %v2414 = vadd.f32 %v2362, %v2370
        %v2415 = vrot.slane %v2414, 4
        %v2416 = vadd.f32 %v2414, %v2415
        %v2417 = vrot.slane %v2416, 2
        %v2418 = vadd.f32 %v2416, %v2417
        %v2419 = vrot.slane %v2418, 1
        %v2420 = vadd.f32 %v2418, %v2419
        %v2421 = vadd.f32 %v2363, %v2371
        %v2422 = vrot.slane %v2421, 4
        %v2423 = vadd.f32 %v2421, %v2422
        %v2424 = vrot.slane %v2423, 2
        %v2425 = vadd.f32 %v2423, %v2424
        %v2426 = vrot.slane %v2425, 1
        %v2427 = vadd.f32 %v2425, %v2426
        %v2428 = vmul.f32 %v1923, %v1783
        %v2429 = vmul.f32 %v1925, %v1784
        %v2430 = vmul.f32 %v2036, %v1785
        %v2431 = vmul.f32 %v2038, %v1786
        %v2432 = vmul.f32 %v2149, %v1787
        %v2433 = vmul.f32 %v2151, %v1788
        %v2434 = vmul.f32 %v2262, %v1789
        %v2435 = vmul.f32 %v2264, %v1790
        %v2436 = vmul.f32 %v1929, %v1791
        %v2437 = vmul.f32 %v1931, %v1792
        %v2438 = vmul.f32 %v2042, %v1793
        %v2439 = vmul.f32 %v2044, %v1794
        %v2440 = vmul.f32 %v2155, %v1795
        %v2441 = vmul.f32 %v2157, %v1796
        %v2442 = vmul.f32 %v2268, %v1797
        %v2443 = vmul.f32 %v2270, %v1798
        %v2444 = vadd.f32 %v2428, %v2436
        %v2445 = vrot.slane %v2444, 4
        %v2446 = vadd.f32 %v2444, %v2445
        %v2447 = vrot.slane %v2446, 2
        %v2448 = vadd.f32 %v2446, %v2447
        %v2449 = vrot.slane %v2448, 1
        %v2450 = vadd.f32 %v2448, %v2449
        %v2451 = vadd.f32 %v2429, %v2437
        %v2452 = vrot.slane %v2451, 4
        %v2453 = vadd.f32 %v2451, %v2452
        %v2454 = vrot.slane %v2453, 2
        %v2455 = vadd.f32 %v2453, %v2454
        %v2456 = vrot.slane %v2455, 1
        %v2457 = vadd.f32 %v2455, %v2456
        %v2458 = vadd.f32 %v2430, %v2438
        %v2459 = vrot.slane %v2458, 4
        %v2460 = vadd.f32 %v2458, %v2459
        %v2461 = vrot.slane %v2460, 2
        %v2462 = vadd.f32 %v2460, %v2461
        %v2463 = vrot.slane %v2462, 1
        %v2464 = vadd.f32 %v2462, %v2463
        %v2465 = vadd.f32 %v2431, %v2439
        %v2466 = vrot.slane %v2465, 4
        %v2467 = vadd.f32 %v2465, %v2466
        %v2468 = vrot.slane %v2467, 2
        %v2469 = vadd.f32 %v2467, %v2468
        %v2470 = vrot.slane %v2469, 1
        %v2471 = vadd.f32 %v2469, %v2470
        %v2472 = vadd.f32 %v2432, %v2440
        %v2473 = vrot.slane %v2472, 4
        %v2474 = vadd.f32 %v2472, %v2473
        %v2475 = vrot.slane %v2474, 2
        %v2476 = vadd.f32 %v2474, %v2475
        %v2477 = vrot.slane %v2476, 1
        %v2478 = vadd.f32 %v2476, %v2477
        %v2479 = vadd.f32 %v2433, %v2441
        %v2480 = vrot.slane %v2479, 4
        %v2481 = vadd.f32 %v2479, %v2480
        %v2482 = vrot.slane %v2481, 2
        %v2483 = vadd.f32 %v2481, %v2482
        %v2484 = vrot.slane %v2483, 1
        %v2485 = vadd.f32 %v2483, %v2484
        %v2486 = vadd.f32 %v2434, %v2442
        %v2487 = vrot.slane %v2486, 4
        %v2488 = vadd.f32 %v2486, %v2487
        %v2489 = vrot.slane %v2488, 2
        %v2490 = vadd.f32 %v2488, %v2489
        %v2491 = vrot.slane %v2490, 1
        %v2492 = vadd.f32 %v2490, %v2491
        %v2493 = vadd.f32 %v2435, %v2443
        %v2494 = vrot.slane %v2493, 4
        %v2495 = vadd.f32 %v2493, %v2494
        %v2496 = vrot.slane %v2495, 2
        %v2497 = vadd.f32 %v2495, %v2496
        %v2498 = vrot.slane %v2497, 1
        %v2499 = vadd.f32 %v2497, %v2498
        %v2500 = vmul.f32 %v1935, %v1783
        %v2501 = vmul.f32 %v1937, %v1784
        %v2502 = vmul.f32 %v2048, %v1785
        %v2503 = vmul.f32 %v2050, %v1786
        %v2504 = vmul.f32 %v2161, %v1787
        %v2505 = vmul.f32 %v2163, %v1788
        %v2506 = vmul.f32 %v2274, %v1789
        %v2507 = vmul.f32 %v2276, %v1790
        %v2508 = vmul.f32 %v1941, %v1791
        %v2509 = vmul.f32 %v1943, %v1792
        %v2510 = vmul.f32 %v2054, %v1793
        %v2511 = vmul.f32 %v2056, %v1794
        %v2512 = vmul.f32 %v2167, %v1795
        %v2513 = vmul.f32 %v2169, %v1796
        %v2514 = vmul.f32 %v2280, %v1797
        %v2515 = vmul.f32 %v2282, %v1798
        %v2516 = vadd.f32 %v2500, %v2508
        %v2517 = vrot.slane %v2516, 4
        %v2518 = vadd.f32 %v2516, %v2517
        %v2519 = vrot.slane %v2518, 2
        %v2520 = vadd.f32 %v2518, %v2519
        %v2521 = vrot.slane %v2520, 1
        %v2522 = vadd.f32 %v2520, %v2521
        %v2523 = vadd.f32 %v2501, %v2509
        %v2524 = vrot.slane %v2523, 4
        %v2525 = vadd.f32 %v2523, %v2524
        %v2526 = vrot.slane %v2525, 2
        %v2527 = vadd.f32 %v2525, %v2526
        %v2528 = vrot.slane %v2527, 1
        %v2529 = vadd.f32 %v2527, %v2528
        %v2530 = vadd.f32 %v2502, %v2510
        %v2531 = vrot.slane %v2530, 4
        %v2532 = vadd.f32 %v2530, %v2531
        %v2533 = vrot.slane %v2532, 2
        %v2534 = vadd.f32 %v2532, %v2533
        %v2535 = vrot.slane %v2534, 1
        %v2536 = vadd.f32 %v2534, %v2535
        %v2537 = vadd.f32 %v2503, %v2511
        %v2538 = vrot.slane %v2537, 4
        %v2539 = vadd.f32 %v2537, %v2538
        %v2540 = vrot.slane %v2539, 2
        %v2541 = vadd.f32 %v2539, %v2540
        %v2542 = vrot.slane %v2541, 1
        %v2543 = vadd.f32 %v2541, %v2542
        %v2544 = vadd.f32 %v2504, %v2512
        %v2545 = vrot.slane %v2544, 4
        %v2546 = vadd.f32 %v2544, %v2545
        %v2547 = vrot.slane %v2546, 2
        %v2548 = vadd.f32 %v2546, %v2547
        %v2549 = vrot.slane %v2548, 1
        %v2550 = vadd.f32 %v2548, %v2549
        %v2551 = vadd.f32 %v2505, %v2513
        %v2552 = vrot.slane %v2551, 4
        %v2553 = vadd.f32 %v2551, %v2552
        %v2554 = vrot.slane %v2553, 2
        %v2555 = vadd.f32 %v2553, %v2554
        %v2556 = vrot.slane %v2555, 1
        %v2557 = vadd.f32 %v2555, %v2556
        %v2558 = vadd.f32 %v2506, %v2514
        %v2559 = vrot.slane %v2558, 4
        %v2560 = vadd.f32 %v2558, %v2559
        %v2561 = vrot.slane %v2560, 2
        %v2562 = vadd.f32 %v2560, %v2561
        %v2563 = vrot.slane %v2562, 1
        %v2564 = vadd.f32 %v2562, %v2563
        %v2565 = vadd.f32 %v2507, %v2515
        %v2566 = vrot.slane %v2565, 4
        %v2567 = vadd.f32 %v2565, %v2566
        %v2568 = vrot.slane %v2567, 2
        %v2569 = vadd.f32 %v2567, %v2568
        %v2570 = vrot.slane %v2569, 1
        %v2571 = vadd.f32 %v2569, %v2570
        %vm2572 = vcmask 1040384
        %v2573 = vsel %vm2572, %v1108, %v1180
        %v2574 = vsel %vm2572, %v1115, %v1187
        %v2575 = vsel %vm2572, %v1122, %v1194
        %v2576 = vsel %vm2572, %v1129, %v1201
        %v2577 = vsel %vm2572, %v1136, %v1208
        %v2578 = vsel %vm2572, %v1143, %v1215
        %v2579 = vsel %vm2572, %v1150, %v1222
        %v2580 = vsel %vm2572, %v1157, %v1229
        %vm2581 = vcmask 1041408
        %v2582 = vsel %vm2581, %v2573, %v1252
        %v2583 = vsel %vm2581, %v2574, %v1259
        %v2584 = vsel %vm2581, %v2575, %v1266
        %v2585 = vsel %vm2581, %v2576, %v1273
        %v2586 = vsel %vm2581, %v2577, %v1280
        %v2587 = vsel %vm2581, %v2578, %v1287
        %v2588 = vsel %vm2581, %v2579, %v1294
        %v2589 = vsel %vm2581, %v2580, %v1301
        %vm2590 = vcmask 1042432
        %v2591 = vsel %vm2590, %v2582, %v1324
        %v2592 = vsel %vm2590, %v2583, %v1331
        %v2593 = vsel %vm2590, %v2584, %v1338
        %v2594 = vsel %vm2590, %v2585, %v1345
        %v2595 = vsel %vm2590, %v2586, %v1352
        %v2596 = vsel %vm2590, %v2587, %v1359
        %v2597 = vsel %vm2590, %v2588, %v1366
        %v2598 = vsel %vm2590, %v2589, %v1373
        %vm2599 = vcmask 1043456
        %v2600 = vsel %vm2599, %v2591, %v2306
        %v2601 = vsel %vm2599, %v2592, %v2313
        %v2602 = vsel %vm2599, %v2593, %v2320
        %v2603 = vsel %vm2599, %v2594, %v2327
        %v2604 = vsel %vm2599, %v2595, %v2334
        %v2605 = vsel %vm2599, %v2596, %v2341
        %v2606 = vsel %vm2599, %v2597, %v2348
        %v2607 = vsel %vm2599, %v2598, %v2355
        %vm2608 = vcmask 1044480
        %v2609 = vsel %vm2608, %v2600, %v2378
        %v2610 = vsel %vm2608, %v2601, %v2385
        %v2611 = vsel %vm2608, %v2602, %v2392
        %v2612 = vsel %vm2608, %v2603, %v2399
        %v2613 = vsel %vm2608, %v2604, %v2406
        %v2614 = vsel %vm2608, %v2605, %v2413
        %v2615 = vsel %vm2608, %v2606, %v2420
        %v2616 = vsel %vm2608, %v2607, %v2427
        %vm2617 = vcmask 1045504
        %v2618 = vsel %vm2617, %v2609, %v2450
        %v2619 = vsel %vm2617, %v2610, %v2457
        %v2620 = vsel %vm2617, %v2611, %v2464
        %v2621 = vsel %vm2617, %v2612, %v2471
        %v2622 = vsel %vm2617, %v2613, %v2478
        %v2623 = vsel %vm2617, %v2614, %v2485
        %v2624 = vsel %vm2617, %v2615, %v2492
        %v2625 = vsel %vm2617, %v2616, %v2499
        %vm2626 = vcmask 1046528
        %v2627 = vsel %vm2626, %v2618, %v2522
        %v2628 = vsel %vm2626, %v2619, %v2529
        %v2629 = vsel %vm2626, %v2620, %v2536
        %v2630 = vsel %vm2626, %v2621, %v2543
        %v2631 = vsel %vm2626, %v2622, %v2550
        %v2632 = vsel %vm2626, %v2623, %v2557
        %v2633 = vsel %vm2626, %v2624, %v2564
        %v2634 = vsel %vm2626, %v2625, %v2571
        %s2635 = smul.u32 0, 8
        %s2636 = smul.addr %s2635, 8
        %s2637 = scalar_lea.vmem %s157, %s2636 [#allocation2]
        %2638 = vst [vmem:[%s2637] sm:$0xff] %v2627
        %2639 = vst [vmem:[%s2637 + $0x8] sm:$0xff] %v2628
        %2640 = vst [vmem:[%s2637 + $0x10] sm:$0xff] %v2629
        %2641 = vst [vmem:[%s2637 + $0x18] sm:$0xff] %v2630
        %2642 = vst [vmem:[%s2637 + $0x20] sm:$0xff] %v2631
        %2643 = vst [vmem:[%s2637 + $0x28] sm:$0xff] %v2632
        %2644 = vst [vmem:[%s2637 + $0x30] sm:$0xff] %v2633
        %2645 = vst [vmem:[%s2637 + $0x38] sm:$0xff] %v2634
        %s2646 = sand.u32 %s76, 1
        %s2647 = scalar_lea.sflag [#allocation3], %s2646
        %s2648 = sand.u32 %s76, 1
        %s2649 = smul.addr %s2648, 64
        %s2650 = scalar_lea.vmem [#allocation2], %s2649
        // Predicated region
        $region29: #{tpu_custom_call.1} parent=27 // pred_check
          %p2651 = pneg %p86
        $region30: #{tpu_custom_call.1} parent=27 // pred_check_branch
          %2653 = sbr.rel (%p2651) target = $region32
        $region31: #{tpu_custom_call.1} parent=27 // pred_region
          %s2655 = ssub.s32 1024, 1024
          %2656 = vsyncadd %s2647, %s2655
          %s2657 = smul.addr %s16, 8
          %s2658 = smul.addr %s2657, 128
          %s2659 = scalar_lea.hbm %s2, %s2658
          %s2661 = sshll.u32 %s2650, 4
          %s2662 = int_to_ptr.vmem [resolvable:$true] %s2661
          %2664 = dma.vmem_to_hbm [thread:$0]  %s2662, 1024, %s2659, %s2647
        $region32: #{tpu_custom_call.1} parent=27 // pred_fallthru
          _
      $region28: #{tpu_custom_call.1} parent=5 // pred_fallthru
        _
      %p2665 = scmp.le.s32.totalorder 2, %s11
      // Predicated region
      $region33: #{tpu_custom_call.1} parent=5 // pred_check
        %p2666 = pneg %p2665
      $region34: #{tpu_custom_call.1} parent=5 // pred_check_branch
        %2668 = sbr.rel (%p2666) target = $region36
      $region35: #{tpu_custom_call.1} parent=5 // pred_region
        %s2669 = ssub.s32 %s11, 2
        // Predicated region
        $region37: #{tpu_custom_call.1} parent=35 // pred_check
          %p2670 = pneg %p92
        $region38: #{tpu_custom_call.1} parent=35 // pred_check_branch
          %2672 = sbr.rel (%p2670) target = $region40
        $region39: #{tpu_custom_call.1} parent=35 // pred_region
          %s2673 = sand.u32 %s77, 1
          %s2674 = scalar_lea.sflag [#allocation3], %s2673
          %s2675 = sand.u32 %s77, 1
          %s2676 = smul.addr %s2675, 64
          %s2677 = scalar_lea.vmem [#allocation2], %s2676
          %2678 = dma.done %s2674, 1024
        $region40: #{tpu_custom_call.1} parent=35 // pred_fallthru
          _
      $region36: #{tpu_custom_call.1} parent=5 // pred_fallthru
        _
    $region6: #{tpu_custom_call.1} parent=1 // loop_footer
      %s15 = sadd.s32 1, %s11
    $region7: #{tpu_custom_call.1} parent=1 // loop_footer_branch
      %10 = sbr.rel target = $region3
    $region8: #{tpu_custom_call.1} parent=1 // loop_exit
      _
    %2679 = vsyncpa [#allocation3], 1
    %s2680 = scalar_lea.sflag [#allocation3], 1
    %2681 = vsyncpa %s2680, 1

</llo_original>
